<compile_context>
chip_gen: v6e
topology: v6e:2x2x1
jax: 0.10.0
libtpu: 0.0.40
codegen_flags: <defaults>
</compile_context>

<pallas_src>
import jax
import jax.numpy as jnp
import numpy as np
from jax.experimental import pallas as pl
from jax.experimental.pallas import tpu as pltpu

NEG_SLOPE = 0.01   # nn.LeakyReLU default
K5 = 5             # all convs are expressed on the 5x5 footprint (zero-padded taps)
PMAX = 2           # spatial padding of the 5x5 footprint


def _leaky(x):
    return jnp.where(x >= 0, x, NEG_SLOPE * x)


# ----------------------------------------------------------------------------
# One fused kernel per batch element:
#   conv  = Wcomb (3C,25C) @ slabs (25C,HW)          -> bias, LeakyReLU
#   r5    = conv_act + tile(v1_flat, 3)              (center tap IS v1)
#   t1    = LeakyReLU(t (N,L) @ Wl^T (L,3C) + bl)    (N,3C)
#   gram  = t1^T @ t1                                 (3C,3C)
#   out   = gram @ r5                                 (3C,HW)  == reference out2^T
# ----------------------------------------------------------------------------
def make_fused_kernel(C):
    center_tap = (K5 // 2) * K5 + (K5 // 2)          # tap (2,2) of the 5x5 footprint

    def kernel(slabs_ref, t_ref, wc_ref, bc_ref, wlT_ref, bl_ref, out_ref):
        slabs = slabs_ref[0]                                             # (25C, HW)

        # --- fused 3-conv block: one MXU matmul, one epilogue pass ---
        conv = jnp.dot(wc_ref[...], slabs,
                       preferred_element_type=jnp.float32)               # (3C, HW)
        conv = _leaky(conv + bc_ref[...])
        center = slabs[center_tap * C:(center_tap + 1) * C, :]           # == v1 flat
        r5 = conv + jnp.concatenate([center, center, center], axis=0)    # (3C, HW)

        # --- text linear + attention chain ---
        t1 = _leaky(jnp.dot(t_ref[0], wlT_ref[...],
                            preferred_element_type=jnp.float32)
                    + bl_ref[...])                                       # (N, 3C)
        gram = jax.lax.dot_general(t1, t1, (((0,), (0,)), ((), ())),
                                   preferred_element_type=jnp.float32)   # (3C, 3C)
        out = jnp.dot(gram, r5, preferred_element_type=jnp.float32)      # (3C, HW)
        out_ref[0] = out.astype(out_ref.dtype)

    return kernel


# ----------------------------------------------------------------------------
# Wrapper
# ----------------------------------------------------------------------------
def ita_forward(v1, t, params):
    B, C, H, W = v1.shape
    _, N, L = t.shape
    C3 = 3 * C
    HW = H * W
    NT = K5 * K5                                     # 25 taps

    # --- combined conv weight: every conv padded onto the 5x5 footprint ---
    def taps(wk):                                    # (C, C, kh, kw) -> (C, 25, C)
        p = (K5 - wk.shape[-1]) // 2
        wk = jnp.pad(wk, ((0, 0), (0, 0), (p, p), (p, p)))
        return jnp.transpose(wk, (0, 2, 3, 1)).reshape(C, NT, C)

    Wc = jnp.concatenate([taps(params["W1"]),
                          taps(params["W2"]),
                          taps(params["W3"])], axis=0).reshape(C3, NT * C)
    bconv = jnp.concatenate([params["b1"], params["b2"], params["b3"]])[:, None]  # (3C,1)

    # --- im2col slabs built with XLA (tiny: 25*C*HW f32 per batch) ---
    vpad = jnp.pad(v1, ((0, 0), (0, 0), (PMAX, PMAX), (PMAX, PMAX)))
    slabs = jnp.stack([vpad[:, :, dy:dy + H, dx:dx + W]
                       for dy in range(K5) for dx in range(K5)], axis=1)  # (B,25,C,H,W)
    slabs = slabs.reshape(B, NT * C, HW)

    WlT = params["Wl"].T                 # (L, 3C)
    bl_row = params["bl"][None, :]       # (1, 3C)

    out_flat = pl.pallas_call(
        make_fused_kernel(C),
        out_shape=jax.ShapeDtypeStruct((B, C3, HW), jnp.float32),
        grid_spec=pltpu.PrefetchScalarGridSpec(
            num_scalar_prefetch=0,
            grid=(B,),
            in_specs=[
                pl.BlockSpec((1, NT * C, HW), lambda b: (b, 0, 0)),   # slabs
                pl.BlockSpec((1, N, L), lambda b: (b, 0, 0)),         # t
                pl.BlockSpec((C3, NT * C), lambda b: (0, 0)),         # combined conv W
                pl.BlockSpec((C3, 1), lambda b: (0, 0)),              # conv bias
                pl.BlockSpec((L, C3), lambda b: (0, 0)),              # Wl^T
                pl.BlockSpec((1, C3), lambda b: (0, 0)),              # bl
            ],
            out_specs=pl.BlockSpec((1, C3, HW), lambda b: (b, 0, 0)),
        ),
        compiler_params=pltpu.CompilerParams(dimension_semantics=("parallel",)),
    )(slabs, t, Wc, bconv, WlT, bl_row)

    return out_flat.reshape(B, C3, H, W)


# ----------------------------------------------------------------------------
# Pure-JAX reference (mirrors the PyTorch forward in eval mode)
# ----------------------------------------------------------------------------
def ita_reference(v1, t, params):
    def conv(x, w, b, pad):
        y = jax.lax.conv_general_dilated(
            x, w, window_strides=(1, 1), padding=[(pad, pad), (pad, pad)],
            dimension_numbers=("NCHW", "OIHW", "NCHW"))
        return y + b[None, :, None, None]

    r1 = _leaky(conv(v1, params["W1"], params["b1"], 0))
    r2 = _leaky(conv(v1, params["W2"], params["b2"], 1))
    r3 = _leaky(conv(v1, params["W3"], params["b3"], 2))
    r4 = jnp.concatenate([r1, r2, r3], axis=1)
    r5 = r4 + jnp.tile(v1, (1, 3, 1, 1))
    B, Cc, H, W = r5.shape
    r6 = jnp.swapaxes(r5.reshape(B, Cc, H * W), -1, -2)
    t1 = _leaky(t @ params["Wl"].T + params["bl"])
    out1 = r6 @ jnp.swapaxes(t1, -1, -2)
    out2 = out1 @ t1
    return jnp.swapaxes(out2, -1, -2).reshape(B, Cc, H, W)


if __name__ == "__main__":
    # make the XLA reference matmuls full f32 so they match the kernel's f32 MXU accumulation
    jax.config.update("jax_default_matmul_precision", "float32")

    B, C, H, W = 2, 4, 16, 16      # v1
    N, L = 8, 32                   # t: (B, N, L); linear_input_channel = L

    key = jax.random.PRNGKey(0)
    ks = jax.random.split(key, 10)
    params = {
        "W1": 0.2 * jax.random.normal(ks[0], (C, C, 1, 1), jnp.float32),
        "b1": 0.1 * jax.random.normal(ks[1], (C,), jnp.float32),
        "W2": 0.2 * jax.random.normal(ks[2], (C, C, 3, 3), jnp.float32),
        "b2": 0.1 * jax.random.normal(ks[3], (C,), jnp.float32),
        "W3": 0.2 * jax.random.normal(ks[4], (C, C, 5, 5), jnp.float32),
        "b3": 0.1 * jax.random.normal(ks[5], (C,), jnp.float32),
        "Wl": 0.2 * jax.random.normal(ks[6], (3 * C, L), jnp.float32),
        "bl": 0.1 * jax.random.normal(ks[7], (3 * C,), jnp.float32),
    }
    v1 = jax.random.normal(ks[8], (B, C, H, W), jnp.float32)
    t = jax.random.normal(ks[9], (B, N, L), jnp.float32)

    out = jax.jit(ita_forward)(v1, t, params)
    out = jax.block_until_ready(out)

    ref = ita_reference(v1, t, params)
    assert out.shape == (B, 3 * C, H, W)
    np.testing.assert_allclose(np.asarray(out), np.asarray(ref), rtol=1e-3, atol=1e-3)

    # TODO(synk): Dropout is implemented as identity (eval-mode forward); train-mode
    # stochastic masking would need pltpu.prng_* inside the kernel.
    print("KERNEL_OK")
</pallas_src>

<mosaic_0001>
module attributes {stable_mosaic.version = 11 : i64} {
  func.func @kernel(%arg0: i32, %arg1: memref<1x100x256xf32, #tpu.memory_space<vmem>>, %arg2: memref<1x8x32xf32, #tpu.memory_space<vmem>>, %arg3: memref<12x100xf32, #tpu.memory_space<vmem>>, %arg4: memref<12x1xf32, #tpu.memory_space<vmem>>, %arg5: memref<32x12xf32, #tpu.memory_space<vmem>>, %arg6: memref<1x12xf32, #tpu.memory_space<vmem>>, %arg7: memref<1x12x256xf32, #tpu.memory_space<vmem>>) attributes {dimension_semantics = [#tpu.dimension_semantics<parallel>], iteration_bounds = array<i64: 2>, scalar_prefetch = 0 : i64, scratch_operands = 0 : i64, tpu.core_type = #tpu.core_type<tc>, window_params = [{transform_indices = @transform_0, window_bounds = array<i64: 1, 100, 256>}, {transform_indices = @transform_1, window_bounds = array<i64: 1, 8, 32>}, {pipeline_mode = #tpu.pipeline_mode<synchronous>, transform_indices = @transform_2, window_bounds = array<i64: 12, 100>}, {pipeline_mode = #tpu.pipeline_mode<synchronous>, transform_indices = @transform_3, window_bounds = array<i64: 12, 1>}, {pipeline_mode = #tpu.pipeline_mode<synchronous>, transform_indices = @transform_4, window_bounds = array<i64: 32, 12>}, {pipeline_mode = #tpu.pipeline_mode<synchronous>, transform_indices = @transform_5, window_bounds = array<i64: 1, 12>}, {transform_indices = @transform_6, window_bounds = array<i64: 1, 12, 256>}]} {
    %c0 = arith.constant 0 : index
    %c0_0 = arith.constant 0 : index
    %c0_1 = arith.constant 0 : index
    %0 = vector.load %arg1[%c0, %c0_0, %c0_1] : memref<1x100x256xf32, #tpu.memory_space<vmem>>, vector<1x100x256xf32>
    %1 = vector.shape_cast %0 : vector<1x100x256xf32> to vector<100x256xf32>
    %c0_2 = arith.constant 0 : index
    %c0_3 = arith.constant 0 : index
    %2 = vector.load %arg3[%c0_2, %c0_3] : memref<12x100xf32, #tpu.memory_space<vmem>>, vector<12x100xf32>
    %cst = arith.constant dense<0.000000e+00> : vector<12x256xf32>
    %3 = tpu.matmul %2, %1, %cst {dimension_numbers = #tpu.dot_dimension_numbers<[1], [0], [0], [1], [0, 0, 1, 1], [], []>, precision = #tpu.contract_precision<fp32>} : vector<12x100xf32>, vector<100x256xf32>, vector<12x256xf32> -> vector<12x256xf32>
    %c0_4 = arith.constant 0 : index
    %c0_5 = arith.constant 0 : index
    %4 = vector.load %arg4[%c0_4, %c0_5] : memref<12x1xf32, #tpu.memory_space<vmem>>, vector<12x1xf32>
    %5 = vector.broadcast %4 : vector<12x1xf32> to vector<12x256xf32>
    %6 = arith.addf %3, %5 : vector<12x256xf32>
    %cst_6 = arith.constant 0.000000e+00 : f32
    %7 = vector.broadcast %cst_6 : f32 to vector<12x256xf32>
    %8 = arith.cmpf oge, %6, %7 : vector<12x256xf32>
    %cst_7 = arith.constant 0.00999999977 : f32
    %9 = vector.broadcast %cst_7 : f32 to vector<12x256xf32>
    %10 = arith.mulf %9, %6 : vector<12x256xf32>
    %11 = arith.select %8, %6, %10 : vector<12x256xi1>, vector<12x256xf32>
    %12 = vector.extract_strided_slice %1 {offsets = [48, 0], sizes = [4, 256], strides = [1, 1]} : vector<100x256xf32> to vector<4x256xf32>
    %13 = tpu.concatenate %12, %12, %12 in 0 : vector<4x256xf32>, vector<4x256xf32>, vector<4x256xf32> -> vector<12x256xf32>
    %14 = arith.addf %11, %13 : vector<12x256xf32>
    %c0_8 = arith.constant 0 : index
    %c0_9 = arith.constant 0 : index
    %c0_10 = arith.constant 0 : index
    %15 = vector.load %arg2[%c0_8, %c0_9, %c0_10] : memref<1x8x32xf32, #tpu.memory_space<vmem>>, vector<1x8x32xf32>
    %16 = vector.shape_cast %15 : vector<1x8x32xf32> to vector<8x32xf32>
    %c0_11 = arith.constant 0 : index
    %c0_12 = arith.constant 0 : index
    %17 = vector.load %arg5[%c0_11, %c0_12] : memref<32x12xf32, #tpu.memory_space<vmem>>, vector<32x12xf32>
    %cst_13 = arith.constant dense<0.000000e+00> : vector<8x12xf32>
    %18 = tpu.matmul %16, %17, %cst_13 {dimension_numbers = #tpu.dot_dimension_numbers<[1], [0], [0], [1], [0, 0, 1, 1], [], []>, precision = #tpu.contract_precision<fp32>} : vector<8x32xf32>, vector<32x12xf32>, vector<8x12xf32> -> vector<8x12xf32>
    %c0_14 = arith.constant 0 : index
    %c0_15 = arith.constant 0 : index
    %19 = vector.load %arg6[%c0_14, %c0_15] : memref<1x12xf32, #tpu.memory_space<vmem>>, vector<1x12xf32>
    %20 = vector.broadcast %19 : vector<1x12xf32> to vector<8x12xf32>
    %21 = arith.addf %18, %20 : vector<8x12xf32>
    %cst_16 = arith.constant 0.000000e+00 : f32
    %22 = vector.broadcast %cst_16 : f32 to vector<8x12xf32>
    %23 = arith.cmpf oge, %21, %22 : vector<8x12xf32>
    %cst_17 = arith.constant 0.00999999977 : f32
    %24 = vector.broadcast %cst_17 : f32 to vector<8x12xf32>
    %25 = arith.mulf %24, %21 : vector<8x12xf32>
    %26 = arith.select %23, %21, %25 : vector<8x12xi1>, vector<8x12xf32>
    %cst_18 = arith.constant dense<0.000000e+00> : vector<12x12xf32>
    %27 = tpu.matmul %26, %26, %cst_18 {dimension_numbers = #tpu.dot_dimension_numbers<[0], [0], [1], [1], [0, 1, 1, 1], [], []>, precision = #tpu.contract_precision<fp32>} : vector<8x12xf32>, vector<8x12xf32>, vector<12x12xf32> -> vector<12x12xf32>
    %cst_19 = arith.constant dense<0.000000e+00> : vector<12x256xf32>
    %28 = tpu.matmul %27, %14, %cst_19 {dimension_numbers = #tpu.dot_dimension_numbers<[1], [0], [0], [1], [0, 0, 1, 1], [], []>, precision = #tpu.contract_precision<fp32>} : vector<12x12xf32>, vector<12x256xf32>, vector<12x256xf32> -> vector<12x256xf32>
    %c0_20 = arith.constant 0 : index
    %c0_21 = arith.constant 0 : index
    %c0_22 = arith.constant 0 : index
    %29 = vector.load %arg7[%c0_20, %c0_21, %c0_22] : memref<1x12x256xf32, #tpu.memory_space<vmem>>, vector<1x12x256xf32>
    %30 = vector.shape_cast %29 : vector<1x12x256xf32> to vector<12x256xf32>
    %31 = vector.shape_cast %28 : vector<12x256xf32> to vector<1x12x256xf32>
    tpu.vector_store %arg7[%c0_20, %c0_21, %c0_22], %31 {strides = array<i32>} : memref<1x12x256xf32, #tpu.memory_space<vmem>>, vector<1x12x256xf32>,
    return
  }
  func.func @transform_0(%arg0: i32) -> (i32, i32, i32) {
    %c0_i32 = arith.constant 0 : i32
    %c0_i32_0 = arith.constant 0 : i32
    %c0_i32_1 = arith.constant 0 : i32
    return %arg0, %c0_i32, %c0_i32_0 : i32, i32, i32
  }
  func.func @transform_1(%arg0: i32) -> (i32, i32, i32) {
    %c0_i32 = arith.constant 0 : i32
    %c0_i32_0 = arith.constant 0 : i32
    %c0_i32_1 = arith.constant 0 : i32
    return %arg0, %c0_i32, %c0_i32_0 : i32, i32, i32
  }
  func.func @transform_2(%arg0: i32) -> (i32, i32) {
    %c0_i32 = arith.constant 0 : i32
    %c0_i32_0 = arith.constant 0 : i32
    %c0_i32_1 = arith.constant 0 : i32
    return %c0_i32, %c0_i32_0 : i32, i32
  }
  func.func @transform_3(%arg0: i32) -> (i32, i32) {
    %c0_i32 = arith.constant 0 : i32
    %c0_i32_0 = arith.constant 0 : i32
    %c0_i32_1 = arith.constant 0 : i32
    return %c0_i32, %c0_i32_0 : i32, i32
  }
  func.func @transform_4(%arg0: i32) -> (i32, i32) {
    %c0_i32 = arith.constant 0 : i32
    %c0_i32_0 = arith.constant 0 : i32
    %c0_i32_1 = arith.constant 0 : i32
    return %c0_i32, %c0_i32_0 : i32, i32
  }
  func.func @transform_5(%arg0: i32) -> (i32, i32) {
    %c0_i32 = arith.constant 0 : i32
    %c0_i32_0 = arith.constant 0 : i32
    %c0_i32_1 = arith.constant 0 : i32
    return %c0_i32, %c0_i32_0 : i32, i32
  }
  func.func @transform_6(%arg0: i32) -> (i32, i32, i32) {
    %c0_i32 = arith.constant 0 : i32
    %c0_i32_0 = arith.constant 0 : i32
    %c0_i32_1 = arith.constant 0 : i32
    return %arg0, %c0_i32, %c0_i32_0 : i32, i32, i32
  }
}

</mosaic_0001>

<llo_original>
// kernel: ita_forward.1
$region0: #{ita_forward.1}
  #allocation0 [shape = 'u32[]', space=smem, size = 0x4, offset = 0x4, fixed_abs, tag = 'smem constant byte address 0x4 - core index']
  #allocation1 [shape = 'u32[144,128]{1,0:T(1,128)}', space=vmem, size = 0x12000, scoped, tag = 'internal scratch']
  %s0 = inlined_call_operand.vmem [shape: f32[2,100,256], index: 0, kind: input, shape index: {}]
  %s1 = inlined_call_operand.vmem [shape: f32[2,8,32], index: 1, kind: input, shape index: {}]
  %s2 = inlined_call_operand.vmem [shape: f32[12,100], index: 2, kind: input, shape index: {}]
  %s3 = inlined_call_operand.vmem [shape: f32[12,1], index: 3, kind: input, shape index: {}]
  %s4 = inlined_call_operand.vmem [shape: f32[32,12], index: 4, kind: input, shape index: {}]
  %s5 = inlined_call_operand.vmem [shape: f32[1,12], index: 5, kind: input, shape index: {}]
  %s6 = inlined_call_operand.vmem [shape: f32[2,12,256], index: 6, kind: output, shape index: {}]
  %s7 = sld [smem:[#allocation0]]
  $region57: #{ita_forward.1} parent=0
    _
  %s9 = ssub.s32 1, %s7
  %s10 = scalar_select 0, %s9, %s7
  loop: start=0, step=1, limit=4
  $region2: #{ita_forward.1} parent=0 // loop_pre_header
    _
  $region3: #{ita_forward.1} parent=0 // loop_header
    %s12 = sphi 0, %s16
    %p13 = scmp.ge.s32.totalorder %s12, 4
    %s22 = sphi 0, %s24
    %s25 = sphi 0, %s22
    %s26 = sphi 0, %s25
    %s42 = sphi 0, %s26
    %s48 = sphi 0, %s50
    %s51 = sphi 0, %s48
    %s52 = sphi 0, %s51
    %s68 = sphi 0, %s52
    %s72 = sphi 0, %s72
    %s74 = sphi 0, %s72
    %s75 = sphi 0, %s74
    %s89 = sphi 0, %s75
    %s93 = sphi 0, %s93
    %s95 = sphi 0, %s93
    %s96 = sphi 0, %s95
    %s110 = sphi 0, %s96
    %s114 = sphi 0, %s114
    %s116 = sphi 0, %s114
    %s117 = sphi 0, %s116
    %s131 = sphi 0, %s117
    %s135 = sphi 0, %s135
    %s137 = sphi 0, %s135
    %s138 = sphi 0, %s137
    %s152 = sphi 0, %s138
    %s158 = sphi 0, %s160
    %s161 = sphi 0, %s158
    %s162 = sphi 0, %s161
    %s178 = sphi 0, %s162
  $region4: #{ita_forward.1} parent=0 // loop_header_branch
    %15 = sbr.rel (%p13) target = $region8
  $region5: #{ita_forward.1} parent=0 // loop_body
    %s17 = ssub.s32 %s12, 1
    %s18 = ssub.s32 %s12, 2
    %s19 = sadd.s32 %s12, 1
    %s20 = ssub.s32 %s12, %s19
    %p21 = scmp.eq.s32.totalorder %s20, 0
    %s23 = sadd.s32 %s22, 1
    %s24 = scalar_select %p21, %s22, %s23
    %p27 = pneg %p21
    %p28 = scmp.eq.s32.totalorder %s12, 1
    %p29 = por %p27, %p28
    %p30 = scmp.ne.s32.totalorder %s22, %s25
    %p31 = scmp.eq.s32.totalorder %s12, 0
    %p32 = por %p30, %p31
    %p33 = scmp.ne.s32.totalorder %s22, %s25
    %p34 = scmp.eq.s32.totalorder %s17, 1
    %p35 = por %p33, %p34
    %p36 = scmp.ne.s32.totalorder %s25, %s26
    %p37 = scmp.eq.s32.totalorder %s17, 0
    %p38 = por %p36, %p37
    %p39 = scmp.ne.s32.totalorder %s25, %s26
    %p40 = scmp.eq.s32.totalorder %s18, 1
    %p41 = por %p39, %p40
    %p43 = scmp.ne.s32.totalorder %s26, %s42
    %p44 = scmp.eq.s32.totalorder %s18, 0
    %p45 = por %p43, %p44
    %s46 = ssub.s32 %s12, %s19
    %p47 = scmp.eq.s32.totalorder %s46, 0
    %s49 = sadd.s32 %s48, 1
    %s50 = scalar_select %p47, %s48, %s49
    %p53 = pneg %p47
    %p54 = scmp.eq.s32.totalorder %s12, 1
    %p55 = por %p53, %p54
    %p56 = scmp.ne.s32.totalorder %s48, %s51
    %p57 = scmp.eq.s32.totalorder %s12, 0
    %p58 = por %p56, %p57
    %p59 = scmp.ne.s32.totalorder %s48, %s51
    %p60 = scmp.eq.s32.totalorder %s17, 1
    %p61 = por %p59, %p60
    %p62 = scmp.ne.s32.totalorder %s51, %s52
    %p63 = scmp.eq.s32.totalorder %s17, 0
    %p64 = por %p62, %p63
    %p65 = scmp.ne.s32.totalorder %s51, %s52
    %p66 = scmp.eq.s32.totalorder %s18, 1
    %p67 = por %p65, %p66
    %p69 = scmp.ne.s32.totalorder %s52, %s68
    %p70 = scmp.eq.s32.totalorder %s18, 0
    %p71 = por %p69, %p70
    %s73 = sadd.s32 %s72, 1
    %p76 = scmp.eq.s32.totalorder %s12, 1
    %p77 = scmp.ne.s32.totalorder %s72, %s74
    %p78 = scmp.eq.s32.totalorder %s12, 0
    %p79 = por %p77, %p78
    %p80 = scmp.ne.s32.totalorder %s72, %s74
    %p81 = scmp.eq.s32.totalorder %s17, 1
    %p82 = por %p80, %p81
    %p83 = scmp.ne.s32.totalorder %s74, %s75
    %p84 = scmp.eq.s32.totalorder %s17, 0
    %p85 = por %p83, %p84
    %p86 = scmp.ne.s32.totalorder %s74, %s75
    %p87 = scmp.eq.s32.totalorder %s18, 1
    %p88 = por %p86, %p87
    %p90 = scmp.ne.s32.totalorder %s75, %s89
    %p91 = scmp.eq.s32.totalorder %s18, 0
    %p92 = por %p90, %p91
    %s94 = sadd.s32 %s93, 1
    %p97 = scmp.eq.s32.totalorder %s12, 1
    %p98 = scmp.ne.s32.totalorder %s93, %s95
    %p99 = scmp.eq.s32.totalorder %s12, 0
    %p100 = por %p98, %p99
    %p101 = scmp.ne.s32.totalorder %s93, %s95
    %p102 = scmp.eq.s32.totalorder %s17, 1
    %p103 = por %p101, %p102
    %p104 = scmp.ne.s32.totalorder %s95, %s96
    %p105 = scmp.eq.s32.totalorder %s17, 0
    %p106 = por %p104, %p105
    %p107 = scmp.ne.s32.totalorder %s95, %s96
    %p108 = scmp.eq.s32.totalorder %s18, 1
    %p109 = por %p107, %p108
    %p111 = scmp.ne.s32.totalorder %s96, %s110
    %p112 = scmp.eq.s32.totalorder %s18, 0
    %p113 = por %p111, %p112
    %s115 = sadd.s32 %s114, 1
    %p118 = scmp.eq.s32.totalorder %s12, 1
    %p119 = scmp.ne.s32.totalorder %s114, %s116
    %p120 = scmp.eq.s32.totalorder %s12, 0
    %p121 = por %p119, %p120
    %p122 = scmp.ne.s32.totalorder %s114, %s116
    %p123 = scmp.eq.s32.totalorder %s17, 1
    %p124 = por %p122, %p123
    %p125 = scmp.ne.s32.totalorder %s116, %s117
    %p126 = scmp.eq.s32.totalorder %s17, 0
    %p127 = por %p125, %p126
    %p128 = scmp.ne.s32.totalorder %s116, %s117
    %p129 = scmp.eq.s32.totalorder %s18, 1
    %p130 = por %p128, %p129
    %p132 = scmp.ne.s32.totalorder %s117, %s131
    %p133 = scmp.eq.s32.totalorder %s18, 0
    %p134 = por %p132, %p133
    %s136 = sadd.s32 %s135, 1
    %p139 = scmp.eq.s32.totalorder %s12, 1
    %p140 = scmp.ne.s32.totalorder %s135, %s137
    %p141 = scmp.eq.s32.totalorder %s12, 0
    %p142 = por %p140, %p141
    %p143 = scmp.ne.s32.totalorder %s135, %s137
    %p144 = scmp.eq.s32.totalorder %s17, 1
    %p145 = por %p143, %p144
    %p146 = scmp.ne.s32.totalorder %s137, %s138
    %p147 = scmp.eq.s32.totalorder %s17, 0
    %p148 = por %p146, %p147
    %p149 = scmp.ne.s32.totalorder %s137, %s138
    %p150 = scmp.eq.s32.totalorder %s18, 1
    %p151 = por %p149, %p150
    %p153 = scmp.ne.s32.totalorder %s138, %s152
    %p154 = scmp.eq.s32.totalorder %s18, 0
    %p155 = por %p153, %p154
    %s156 = ssub.s32 %s12, %s19
    %p157 = scmp.eq.s32.totalorder %s156, 0
    %s159 = sadd.s32 %s158, 1
    %s160 = scalar_select %p157, %s158, %s159
    %p163 = pneg %p157
    %p164 = scmp.eq.s32.totalorder %s12, 1
    %p165 = por %p163, %p164
    %p166 = scmp.ne.s32.totalorder %s158, %s161
    %p167 = scmp.eq.s32.totalorder %s12, 0
    %p168 = por %p166, %p167
    %p169 = scmp.ne.s32.totalorder %s158, %s161
    %p170 = scmp.eq.s32.totalorder %s17, 1
    %p171 = por %p169, %p170
    %p172 = scmp.ne.s32.totalorder %s161, %s162
    %p173 = scmp.eq.s32.totalorder %s17, 0
    %p174 = por %p172, %p173
    %p175 = scmp.ne.s32.totalorder %s161, %s162
    %p176 = scmp.eq.s32.totalorder %s18, 1
    %p177 = por %p175, %p176
    %p179 = scmp.ne.s32.totalorder %s162, %s178
    %p180 = scmp.eq.s32.totalorder %s18, 0
    %p181 = por %p179, %p180
    %p182 = scmp.le.s32.totalorder 1, %s12
    %p183 = scmp.lt.s32.totalorder %s12, 3
    %p184 = pnand %p182, %p183
    %p185 = pneg %p184
    // Predicated region
    $region9: #{ita_forward.1} parent=5 // pred_check
      _
    $region10: #{ita_forward.1} parent=5 // pred_check_branch
      %187 = sbr.rel (%p184) target = $region12
    $region11: #{ita_forward.1} parent=5 // pred_region
      %s188 = ssub.s32 %s12, 1
      // Predicated region
      $region13: #{ita_forward.1} parent=11 // pred_check
        %p189 = pneg %p85
      $region14: #{ita_forward.1} parent=11 // pred_check_branch
        %191 = sbr.rel (%p189) target = $region16
      $region15: #{ita_forward.1} parent=11 // pred_region
        _
      $region16: #{ita_forward.1} parent=11 // pred_fallthru
        _
      // Predicated region
      $region17: #{ita_forward.1} parent=11 // pred_check
        %p192 = pneg %p106
      $region18: #{ita_forward.1} parent=11 // pred_check_branch
        %194 = sbr.rel (%p192) target = $region20
      $region19: #{ita_forward.1} parent=11 // pred_region
        _
      $region20: #{ita_forward.1} parent=11 // pred_fallthru
        _
      // Predicated region
      $region21: #{ita_forward.1} parent=11 // pred_check
        %p195 = pneg %p127
      $region22: #{ita_forward.1} parent=11 // pred_check_branch
        %197 = sbr.rel (%p195) target = $region24
      $region23: #{ita_forward.1} parent=11 // pred_region
        _
      $region24: #{ita_forward.1} parent=11 // pred_fallthru
        _
      // Predicated region
      $region25: #{ita_forward.1} parent=11 // pred_check
        %p198 = pneg %p148
      $region26: #{ita_forward.1} parent=11 // pred_check_branch
        %200 = sbr.rel (%p198) target = $region28
      $region27: #{ita_forward.1} parent=11 // pred_region
        _
      $region28: #{ita_forward.1} parent=11 // pred_fallthru
        _
    $region12: #{ita_forward.1} parent=5 // pred_fallthru
      _
    %p201 = scmp.lt.s32.totalorder %s12, 2
    // Predicated region
    $region29: #{ita_forward.1} parent=5 // pred_check
      %p202 = pneg %p201
    $region30: #{ita_forward.1} parent=5 // pred_check_branch
      %204 = sbr.rel (%p202) target = $region32
    $region31: #{ita_forward.1} parent=5 // pred_region
      // Predicated region
      $region33: #{ita_forward.1} parent=31 // pred_check
        %p205 = pneg %p32
      $region34: #{ita_forward.1} parent=31 // pred_check_branch
        %207 = sbr.rel (%p205) target = $region36
      $region35: #{ita_forward.1} parent=31 // pred_region
        %p208 = scmp.lt.s32.totalorder %s12, 1
        %s209 = scalar_select %p208, %s12, 1
        %s210 = smul.addr %s209, 26
        %s211 = smul.addr %s210, 8
        %s212 = scalar_lea.vmem %s0, %s211
      $region36: #{ita_forward.1} parent=31 // pred_fallthru
        _
      // Predicated region
      $region37: #{ita_forward.1} parent=31 // pred_check
        %p213 = pneg %p58
      $region38: #{ita_forward.1} parent=31 // pred_check_branch
        %215 = sbr.rel (%p213) target = $region40
      $region39: #{ita_forward.1} parent=31 // pred_region
        %p216 = scmp.lt.s32.totalorder %s12, 1
        %s217 = scalar_select %p216, %s12, 1
        %s218 = smul.addr %s217, 8
        %s219 = scalar_lea.vmem %s1, %s218
      $region40: #{ita_forward.1} parent=31 // pred_fallthru
        _
    $region32: #{ita_forward.1} parent=5 // pred_fallthru
      _
    %p220 = scmp.le.s32.totalorder 1, %s12
    %p221 = scmp.lt.s32.totalorder %s12, 3
    %p222 = pnand %p220, %p221
    %p223 = pneg %p222
    // Predicated region
    $region41: #{ita_forward.1} parent=5 // pred_check
      _
    $region42: #{ita_forward.1} parent=5 // pred_check_branch
      %225 = sbr.rel (%p222) target = $region44
    $region43: #{ita_forward.1} parent=5 // pred_region
      %s226 = ssub.s32 %s12, 1
      %p227 = scmp.lt.s32.totalorder %s17, 1
      %s228 = scalar_select %p227, %s17, 1
      %s229 = smul.addr %s228, 26
      %s230 = smul.addr %s229, 8
      %s231 = scalar_lea.vmem %s0, %s230
      %p232 = pneg %p38
      %p233 = pneg %p35
      %p234 = scmp.lt.s32.totalorder %s17, 1
      %s235 = scalar_select %p234, %s17, 1
      %s236 = smul.addr %s235, 8
      %s237 = scalar_lea.vmem %s1, %s236
      %p238 = pneg %p64
      %p239 = pneg %p61
      %p240 = pneg %p85
      %p241 = pneg %p82
      %p242 = pneg %p106
      %p243 = pneg %p103
      %p244 = pneg %p127
      %p245 = pneg %p124
      %p246 = pneg %p148
      %p247 = pneg %p145
      %p248 = pneg %p174
      %p249 = pneg %p171
      %p250 = scmp.lt.s32.totalorder %s17, 1
      %s251 = scalar_select %p250, %s17, 1
      %s252 = smul.addr %s251, 4
      %s253 = smul.addr %s252, 8
      %s254 = scalar_lea.vmem %s6, %s253
      %p255 = scmp.lt.s32.totalorder %s17, 1
      %s256 = scalar_select %p255, %s17, 1
      %s257 = smul.addr %s256, 26
      %s258 = smul.addr %s257, 8
      %s259 = scalar_lea.vmem %s0, %s258
      %p260 = scmp.lt.s32.totalorder %s17, 1
      %s261 = scalar_select %p260, %s17, 1
      %s262 = smul.addr %s261, 8
      %s263 = scalar_lea.vmem %s1, %s262
      %p264 = scmp.lt.s32.totalorder %s17, 1
      %s265 = scalar_select %p264, %s17, 1
      %s266 = smul.addr %s265, 4
      %s267 = smul.addr %s266, 8
      %s268 = scalar_lea.vmem %s6, %s267
      %v269 = vld [vmem:[%s259] sm:$0xff]
      %v270 = vld [vmem:[%s259 + $0x8] sm:$0xff]
      %v271 = vld [vmem:[%s259 + $0x10] sm:$0xff]
      %v272 = vld [vmem:[%s259 + $0x18] sm:$0xff]
      %v273 = vld [vmem:[%s259 + $0x20] sm:$0xff]
      %v274 = vld [vmem:[%s259 + $0x28] sm:$0xff]
      %v275 = vld [vmem:[%s259 + $0x30] sm:$0xff]
      %v276 = vld [vmem:[%s259 + $0x38] sm:$0xff]
      %v277 = vld [vmem:[%s259 + $0x40] sm:$0xff]
      %v278 = vld [vmem:[%s259 + $0x48] sm:$0xff]
      %v279 = vld [vmem:[%s259 + $0x50] sm:$0xff]
      %v280 = vld [vmem:[%s259 + $0x58] sm:$0xff]
      %v281 = vld [vmem:[%s259 + $0x60] sm:$0xff]
      %v282 = vld [vmem:[%s259 + $0x68] sm:$0xff]
      %v283 = vld [vmem:[%s259 + $0x70] sm:$0xff]
      %v284 = vld [vmem:[%s259 + $0x78] sm:$0xff]
      %v285 = vld [vmem:[%s259 + $0x80] sm:$0xff]
      %v286 = vld [vmem:[%s259 + $0x88] sm:$0xff]
      %v287 = vld [vmem:[%s259 + $0x90] sm:$0xff]
      %v288 = vld [vmem:[%s259 + $0x98] sm:$0xff]
      %v289 = vld [vmem:[%s259 + $0xa0] sm:$0xff]
      %v290 = vld [vmem:[%s259 + $0xa8] sm:$0xff]
      %v291 = vld [vmem:[%s259 + $0xb0] sm:$0xff]
      %v292 = vld [vmem:[%s259 + $0xb8] sm:$0xff]
      %v293 = vld [vmem:[%s259 + $0xc0] sm:$0xf]
      %v294 = vld [vmem:[%s259 + $0xc8] sm:$0xf]
      %v295 = vld [vmem:[%s2] sm:$0xff]
      %v296 = vld [vmem:[%s2 + $0x8] sm:$0xf]
      %v297 = vld [vmem:[%s3] sm:$0xff]
      %v298 = vld [vmem:[%s3 + $0x8] sm:$0xf]
      %300 = vset.pattern.permute.xlu0 0
      %301 = vperm.xlu0 %300, %v297
      %v302 = vpop.permute.xlu0 %301
      %305 = vset.pattern.permute.xlu0 0
      %306 = vperm.xlu0 %305, %v298
      %v307 = vpop.permute.xlu0 %306
      %vm309 = vcmask 818176
      %v311 = vsel %vm309, %v295, 0
      %v314 = vsel %vm309, %v296, 0
      %vm316 = vcmask 1043456
      %v318 = vsel %vm316, %v293, 0
      %v321 = vsel %vm316, %v294, 0
      %323 = vmatprep.subr.mxu0 0.0
      %324 = vmatpush1.msra.mxu0 0.0
      %325 = vmatprep.subr.mxu0 0.0
      %326 = vmatpush1.msra.mxu0 0.0
      %327 = vmatprep.subr.mxu0 0.0
      %328 = vmatpush1.msra.mxu0 0.0
      %v329 = vand.u32 %v321, 4294901760
      %330 = vmatprep.subr.mxu0 %v329
      %v331 = vand.u32 %v318, 4294901760
      %332 = vmatpush1.msra.mxu0 %v331
      %v333 = vand.u32 %v292, 4294901760
      %334 = vmatprep.subr.mxu0 %v333
      %v335 = vand.u32 %v291, 4294901760
      %336 = vmatpush1.msra.mxu0 %v335
      %v337 = vand.u32 %v290, 4294901760
      %338 = vmatprep.subr.mxu0 %v337
      %v339 = vand.u32 %v289, 4294901760
      %340 = vmatpush1.msra.mxu0 %v339
      %v341 = vand.u32 %v288, 4294901760
      %342 = vmatprep.subr.mxu0 %v341
      %v343 = vand.u32 %v287, 4294901760
      %344 = vmatpush1.msra.mxu0 %v343
      %v345 = vand.u32 %v286, 4294901760
      %346 = vmatprep.subr.mxu0 %v345
      %v347 = vand.u32 %v285, 4294901760
      %348 = vmatpush1.msra.mxu0 %v347
      %v349 = vand.u32 %v284, 4294901760
      %350 = vmatprep.subr.mxu0 %v349
      %v351 = vand.u32 %v283, 4294901760
      %352 = vmatpush1.msra.mxu0 %v351
      %v353 = vand.u32 %v282, 4294901760
      %354 = vmatprep.subr.mxu0 %v353
      %v355 = vand.u32 %v281, 4294901760
      %356 = vmatpush1.msra.mxu0 %v355
      %v357 = vand.u32 %v280, 4294901760
      %358 = vmatprep.subr.mxu0 %v357
      %v359 = vand.u32 %v279, 4294901760
      %360 = vmatpush1.msra.mxu0 %v359
      %v361 = vand.u32 %v278, 4294901760
      %362 = vmatprep.subr.mxu0 %v361
      %v363 = vand.u32 %v277, 4294901760
      %364 = vmatpush1.msra.mxu0 %v363
      %v365 = vand.u32 %v276, 4294901760
      %366 = vmatprep.subr.mxu0 %v365
      %v367 = vand.u32 %v275, 4294901760
      %368 = vmatpush1.msra.mxu0 %v367
      %v369 = vand.u32 %v274, 4294901760
      %370 = vmatprep.subr.mxu0 %v369
      %v371 = vand.u32 %v273, 4294901760
      %372 = vmatpush1.msra.mxu0 %v371
      %v373 = vand.u32 %v272, 4294901760
      %374 = vmatprep.subr.mxu0 %v373
      %v375 = vand.u32 %v271, 4294901760
      %376 = vmatpush1.msra.mxu0 %v375
      %v377 = vand.u32 %v270, 4294901760
      %378 = vmatprep.subr.mxu0 %v377
      %v379 = vand.u32 %v269, 4294901760
      %380 = vmatpush1.msra.mxu0 %v379
      %381 = vmatprep.subr.mxu0 0.0
      %382 = vmatpush2.msra.mxu0 0.0
      %383 = vmatprep.subr.mxu0 0.0
      %384 = vmatpush2.msra.mxu0 0.0
      %385 = vmatprep.subr.mxu0 0.0
      %386 = vmatpush2.msra.mxu0 0.0
      %387 = vmatprep.subr.mxu0 0.0
      %388 = vmatpush2.msra.mxu0 0.0
      %389 = vmatprep.subr.mxu0 0.0
      %390 = vmatpush2.msra.mxu0 0.0
      %391 = vmatprep.subr.mxu0 0.0
      %392 = vmatpush2.msra.mxu0 0.0
      %393 = vmatprep.subr.mxu0 0.0
      %394 = vmatpush2.msra.mxu0 0.0
      %395 = vmatprep.subr.mxu0 0.0
      %396 = vmatpush2.msra.mxu0 0.0
      %397 = vmatprep.subr.mxu0 0.0
      %398 = vmatpush2.msra.mxu0 0.0
      %399 = vmatprep.subr.mxu0 0.0
      %400 = vmatpush2.msra.mxu0 0.0
      %401 = vmatprep.subr.mxu0 0.0
      %402 = vmatpush2.msra.mxu0 0.0
      %403 = vmatprep.subr.mxu0 0.0
      %404 = vmatpush2.msra.mxu0 0.0
      %405 = vmatprep.subr.mxu0 0.0
      %406 = vmatpush2.msra.mxu0 0.0
      %407 = vmatprep.subr.mxu0 0.0
      %408 = vmatpush2.msra.mxu0 0.0
      %409 = vmatprep.subr.mxu0 0.0
      %410 = vmatpush2.msra.mxu0 0.0
      %411 = vmatprep.subr.mxu0 0.0
      %412 = vmatpush2.msra.mxu0 0.0
      %413 = vmatprep.mubr.f32.mxu0 0.0
      %v414 = vand.u32 %v311, 4294901760
      %v415 = vsub.f32 %v311, %v414
      %v416 = vand.u32 %v415, 4294901760
      %v417 = vsub.f32 %v415, %v416
      %v418 = vand.u32 %v417, 4294901760
      %419 = vmatmul.mubr.f32.gmra.mxu0 %v418
      %v420 = vpop.f32.mrf.mxu0
      %v421 = vadd.f32 %v302, %v420
      %v422 = vpop.f32.mrf.mxu0
      %v423 = vadd.f32 %v302, %v422
      %424 = vmatprep.mubr.f32.mxu0 0.0
      %v425 = vand.u32 %v314, 4294901760
      %v426 = vsub.f32 %v314, %v425
      %v427 = vand.u32 %v426, 4294901760
      %v428 = vsub.f32 %v426, %v427
      %v429 = vand.u32 %v428, 4294901760
      %430 = vmatmul.mubr.f32.gmra.mxu0 %v429
      %v431 = vpop.f32.mrf.mxu0
      %v432 = vadd.f32 %v307, %v431
      %v433 = vpop.f32.mrf.mxu0
      %v434 = vadd.f32 %v307, %v433
      %435 = vdwg.mxu0
      %436 = vmatprep.subr.mxu0 0.0
      %437 = vmatpush1.msra.mxu0 0.0
      %438 = vmatprep.subr.mxu0 0.0
      %439 = vmatpush1.msra.mxu0 0.0
      %440 = vmatprep.subr.mxu0 0.0
      %441 = vmatpush1.msra.mxu0 0.0
      %v442 = vand.u32 %v321, 4294901760
      %v443 = vsub.f32 %v321, %v442
      %v444 = vand.u32 %v443, 4294901760
      %v445 = vsub.f32 %v443, %v444
      %v446 = vand.u32 %v445, 4294901760
      %447 = vmatprep.subr.mxu0 %v446
      %v448 = vand.u32 %v318, 4294901760
      %v449 = vsub.f32 %v318, %v448
      %v450 = vand.u32 %v449, 4294901760
      %v451 = vsub.f32 %v449, %v450
      %v452 = vand.u32 %v451, 4294901760
      %453 = vmatpush1.msra.mxu0 %v452
      %v454 = vand.u32 %v292, 4294901760
      %v455 = vsub.f32 %v292, %v454
      %v456 = vand.u32 %v455, 4294901760
      %v457 = vsub.f32 %v455, %v456
      %v458 = vand.u32 %v457, 4294901760
      %459 = vmatprep.subr.mxu0 %v458
      %v460 = vand.u32 %v291, 4294901760
      %v461 = vsub.f32 %v291, %v460
      %v462 = vand.u32 %v461, 4294901760
      %v463 = vsub.f32 %v461, %v462
      %v464 = vand.u32 %v463, 4294901760
      %465 = vmatpush1.msra.mxu0 %v464
      %v466 = vand.u32 %v290, 4294901760
      %v467 = vsub.f32 %v290, %v466
      %v468 = vand.u32 %v467, 4294901760
      %v469 = vsub.f32 %v467, %v468
      %v470 = vand.u32 %v469, 4294901760
      %471 = vmatprep.subr.mxu0 %v470
      %v472 = vand.u32 %v289, 4294901760
      %v473 = vsub.f32 %v289, %v472
      %v474 = vand.u32 %v473, 4294901760
      %v475 = vsub.f32 %v473, %v474
      %v476 = vand.u32 %v475, 4294901760
      %477 = vmatpush1.msra.mxu0 %v476
      %v478 = vand.u32 %v288, 4294901760
      %v479 = vsub.f32 %v288, %v478
      %v480 = vand.u32 %v479, 4294901760
      %v481 = vsub.f32 %v479, %v480
      %v482 = vand.u32 %v481, 4294901760
      %483 = vmatprep.subr.mxu0 %v482
      %v484 = vand.u32 %v287, 4294901760
      %v485 = vsub.f32 %v287, %v484
      %v486 = vand.u32 %v485, 4294901760
      %v487 = vsub.f32 %v485, %v486
      %v488 = vand.u32 %v487, 4294901760
      %489 = vmatpush1.msra.mxu0 %v488
      %v490 = vand.u32 %v286, 4294901760
      %v491 = vsub.f32 %v286, %v490
      %v492 = vand.u32 %v491, 4294901760
      %v493 = vsub.f32 %v491, %v492
      %v494 = vand.u32 %v493, 4294901760
      %495 = vmatprep.subr.mxu0 %v494
      %v496 = vand.u32 %v285, 4294901760
      %v497 = vsub.f32 %v285, %v496
      %v498 = vand.u32 %v497, 4294901760
      %v499 = vsub.f32 %v497, %v498
      %v500 = vand.u32 %v499, 4294901760
      %501 = vmatpush1.msra.mxu0 %v500
      %v502 = vand.u32 %v284, 4294901760
      %v503 = vsub.f32 %v284, %v502
      %v504 = vand.u32 %v503, 4294901760
      %v505 = vsub.f32 %v503, %v504
      %v506 = vand.u32 %v505, 4294901760
      %507 = vmatprep.subr.mxu0 %v506
      %v508 = vand.u32 %v283, 4294901760
      %v509 = vsub.f32 %v283, %v508
      %v510 = vand.u32 %v509, 4294901760
      %v511 = vsub.f32 %v509, %v510
      %v512 = vand.u32 %v511, 4294901760
      %513 = vmatpush1.msra.mxu0 %v512
      %v514 = vand.u32 %v282, 4294901760
      %v515 = vsub.f32 %v282, %v514
      %v516 = vand.u32 %v515, 4294901760
      %v517 = vsub.f32 %v515, %v516
      %v518 = vand.u32 %v517, 4294901760
      %519 = vmatprep.subr.mxu0 %v518
      %v520 = vand.u32 %v281, 4294901760
      %v521 = vsub.f32 %v281, %v520
      %v522 = vand.u32 %v521, 4294901760
      %v523 = vsub.f32 %v521, %v522
      %v524 = vand.u32 %v523, 4294901760
      %525 = vmatpush1.msra.mxu0 %v524
      %v526 = vand.u32 %v280, 4294901760
      %v527 = vsub.f32 %v280, %v526
      %v528 = vand.u32 %v527, 4294901760
      %v529 = vsub.f32 %v527, %v528
      %v530 = vand.u32 %v529, 4294901760
      %531 = vmatprep.subr.mxu0 %v530
      %v532 = vand.u32 %v279, 4294901760
      %v533 = vsub.f32 %v279, %v532
      %v534 = vand.u32 %v533, 4294901760
      %v535 = vsub.f32 %v533, %v534
      %v536 = vand.u32 %v535, 4294901760
      %537 = vmatpush1.msra.mxu0 %v536
      %v538 = vand.u32 %v278, 4294901760
      %v539 = vsub.f32 %v278, %v538
      %v540 = vand.u32 %v539, 4294901760
      %v541 = vsub.f32 %v539, %v540
      %v542 = vand.u32 %v541, 4294901760
      %543 = vmatprep.subr.mxu0 %v542
      %v544 = vand.u32 %v277, 4294901760
      %v545 = vsub.f32 %v277, %v544
      %v546 = vand.u32 %v545, 4294901760
      %v547 = vsub.f32 %v545, %v546
      %v548 = vand.u32 %v547, 4294901760
      %549 = vmatpush1.msra.mxu0 %v548
      %v550 = vand.u32 %v276, 4294901760
      %v551 = vsub.f32 %v276, %v550
      %v552 = vand.u32 %v551, 4294901760
      %v553 = vsub.f32 %v551, %v552
      %v554 = vand.u32 %v553, 4294901760
      %555 = vmatprep.subr.mxu0 %v554
      %v556 = vand.u32 %v275, 4294901760
      %v557 = vsub.f32 %v275, %v556
      %v558 = vand.u32 %v557, 4294901760
      %v559 = vsub.f32 %v557, %v558
      %v560 = vand.u32 %v559, 4294901760
      %561 = vmatpush1.msra.mxu0 %v560
      %v562 = vand.u32 %v274, 4294901760
      %v563 = vsub.f32 %v274, %v562
      %v564 = vand.u32 %v563, 4294901760
      %v565 = vsub.f32 %v563, %v564
      %v566 = vand.u32 %v565, 4294901760
      %567 = vmatprep.subr.mxu0 %v566
      %v568 = vand.u32 %v273, 4294901760
      %v569 = vsub.f32 %v273, %v568
      %v570 = vand.u32 %v569, 4294901760
      %v571 = vsub.f32 %v569, %v570
      %v572 = vand.u32 %v571, 4294901760
      %573 = vmatpush1.msra.mxu0 %v572
      %v574 = vand.u32 %v272, 4294901760
      %v575 = vsub.f32 %v272, %v574
      %v576 = vand.u32 %v575, 4294901760
      %v577 = vsub.f32 %v575, %v576
      %v578 = vand.u32 %v577, 4294901760
      %579 = vmatprep.subr.mxu0 %v578
      %v580 = vand.u32 %v271, 4294901760
      %v581 = vsub.f32 %v271, %v580
      %v582 = vand.u32 %v581, 4294901760
      %v583 = vsub.f32 %v581, %v582
      %v584 = vand.u32 %v583, 4294901760
      %585 = vmatpush1.msra.mxu0 %v584
      %v586 = vand.u32 %v270, 4294901760
      %v587 = vsub.f32 %v270, %v586
      %v588 = vand.u32 %v587, 4294901760
      %v589 = vsub.f32 %v587, %v588
      %v590 = vand.u32 %v589, 4294901760
      %591 = vmatprep.subr.mxu0 %v590
      %v592 = vand.u32 %v269, 4294901760
      %v593 = vsub.f32 %v269, %v592
      %v594 = vand.u32 %v593, 4294901760
      %v595 = vsub.f32 %v593, %v594
      %v596 = vand.u32 %v595, 4294901760
      %597 = vmatpush1.msra.mxu0 %v596
      %598 = vmatprep.subr.mxu0 0.0
      %599 = vmatpush2.msra.mxu0 0.0
      %600 = vmatprep.subr.mxu0 0.0
      %601 = vmatpush2.msra.mxu0 0.0
      %602 = vmatprep.subr.mxu0 0.0
      %603 = vmatpush2.msra.mxu0 0.0
      %604 = vmatprep.subr.mxu0 0.0
      %605 = vmatpush2.msra.mxu0 0.0
      %606 = vmatprep.subr.mxu0 0.0
      %607 = vmatpush2.msra.mxu0 0.0
      %608 = vmatprep.subr.mxu0 0.0
      %609 = vmatpush2.msra.mxu0 0.0
      %610 = vmatprep.subr.mxu0 0.0
      %611 = vmatpush2.msra.mxu0 0.0
      %612 = vmatprep.subr.mxu0 0.0
      %613 = vmatpush2.msra.mxu0 0.0
      %614 = vmatprep.subr.mxu0 0.0
      %615 = vmatpush2.msra.mxu0 0.0
      %616 = vmatprep.subr.mxu0 0.0
      %617 = vmatpush2.msra.mxu0 0.0
      %618 = vmatprep.subr.mxu0 0.0
      %619 = vmatpush2.msra.mxu0 0.0
      %620 = vmatprep.subr.mxu0 0.0
      %621 = vmatpush2.msra.mxu0 0.0
      %622 = vmatprep.subr.mxu0 0.0
      %623 = vmatpush2.msra.mxu0 0.0
      %624 = vmatprep.subr.mxu0 0.0
      %625 = vmatpush2.msra.mxu0 0.0
      %626 = vmatprep.subr.mxu0 0.0
      %627 = vmatpush2.msra.mxu0 0.0
      %628 = vmatprep.subr.mxu0 0.0
      %629 = vmatpush2.msra.mxu0 0.0
      %630 = vmatprep.mubr.f32.mxu0 0.0
      %v631 = vand.u32 %v311, 4294901760
      %632 = vmatmul.mubr.f32.gmra.mxu0 %v631
      %v633 = vpop.f32.mrf.mxu0
      %v634 = vadd.f32 %v421, %v633
      %v635 = vpop.f32.mrf.mxu0
      %v636 = vadd.f32 %v423, %v635
      %637 = vmatprep.mubr.f32.mxu0 0.0
      %v638 = vand.u32 %v314, 4294901760
      %639 = vmatmul.mubr.f32.gmra.mxu0 %v638
      %v640 = vpop.f32.mrf.mxu0
      %v641 = vadd.f32 %v432, %v640
      %v642 = vpop.f32.mrf.mxu0
      %v643 = vadd.f32 %v434, %v642
      %644 = vdwg.mxu0
      %645 = vmatprep.subr.mxu0 0.0
      %646 = vmatpush1.msra.mxu0 0.0
      %647 = vmatprep.subr.mxu0 0.0
      %648 = vmatpush1.msra.mxu0 0.0
      %649 = vmatprep.subr.mxu0 0.0
      %650 = vmatpush1.msra.mxu0 0.0
      %v651 = vand.u32 %v321, 4294901760
      %v652 = vsub.f32 %v321, %v651
      %653 = vmatprep.subr.mxu0 %v652
      %v654 = vand.u32 %v318, 4294901760
      %v655 = vsub.f32 %v318, %v654
      %656 = vmatpush1.msra.mxu0 %v655
      %v657 = vand.u32 %v292, 4294901760
      %v658 = vsub.f32 %v292, %v657
      %659 = vmatprep.subr.mxu0 %v658
      %v660 = vand.u32 %v291, 4294901760
      %v661 = vsub.f32 %v291, %v660
      %662 = vmatpush1.msra.mxu0 %v661
      %v663 = vand.u32 %v290, 4294901760
      %v664 = vsub.f32 %v290, %v663
      %665 = vmatprep.subr.mxu0 %v664
      %v666 = vand.u32 %v289, 4294901760
      %v667 = vsub.f32 %v289, %v666
      %668 = vmatpush1.msra.mxu0 %v667
      %v669 = vand.u32 %v288, 4294901760
      %v670 = vsub.f32 %v288, %v669
      %671 = vmatprep.subr.mxu0 %v670
      %v672 = vand.u32 %v287, 4294901760
      %v673 = vsub.f32 %v287, %v672
      %674 = vmatpush1.msra.mxu0 %v673
      %v675 = vand.u32 %v286, 4294901760
      %v676 = vsub.f32 %v286, %v675
      %677 = vmatprep.subr.mxu0 %v676
      %v678 = vand.u32 %v285, 4294901760
      %v679 = vsub.f32 %v285, %v678
      %680 = vmatpush1.msra.mxu0 %v679
      %v681 = vand.u32 %v284, 4294901760
      %v682 = vsub.f32 %v284, %v681
      %683 = vmatprep.subr.mxu0 %v682
      %v684 = vand.u32 %v283, 4294901760
      %v685 = vsub.f32 %v283, %v684
      %686 = vmatpush1.msra.mxu0 %v685
      %v687 = vand.u32 %v282, 4294901760
      %v688 = vsub.f32 %v282, %v687
      %689 = vmatprep.subr.mxu0 %v688
      %v690 = vand.u32 %v281, 4294901760
      %v691 = vsub.f32 %v281, %v690
      %692 = vmatpush1.msra.mxu0 %v691
      %v693 = vand.u32 %v280, 4294901760
      %v694 = vsub.f32 %v280, %v693
      %695 = vmatprep.subr.mxu0 %v694
      %v696 = vand.u32 %v279, 4294901760
      %v697 = vsub.f32 %v279, %v696
      %698 = vmatpush1.msra.mxu0 %v697
      %v699 = vand.u32 %v278, 4294901760
      %v700 = vsub.f32 %v278, %v699
      %701 = vmatprep.subr.mxu0 %v700
      %v702 = vand.u32 %v277, 4294901760
      %v703 = vsub.f32 %v277, %v702
      %704 = vmatpush1.msra.mxu0 %v703
      %v705 = vand.u32 %v276, 4294901760
      %v706 = vsub.f32 %v276, %v705
      %707 = vmatprep.subr.mxu0 %v706
      %v708 = vand.u32 %v275, 4294901760
      %v709 = vsub.f32 %v275, %v708
      %710 = vmatpush1.msra.mxu0 %v709
      %v711 = vand.u32 %v274, 4294901760
      %v712 = vsub.f32 %v274, %v711
      %713 = vmatprep.subr.mxu0 %v712
      %v714 = vand.u32 %v273, 4294901760
      %v715 = vsub.f32 %v273, %v714
      %716 = vmatpush1.msra.mxu0 %v715
      %v717 = vand.u32 %v272, 4294901760
      %v718 = vsub.f32 %v272, %v717
      %719 = vmatprep.subr.mxu0 %v718
      %v720 = vand.u32 %v271, 4294901760
      %v721 = vsub.f32 %v271, %v720
      %722 = vmatpush1.msra.mxu0 %v721
      %v723 = vand.u32 %v270, 4294901760
      %v724 = vsub.f32 %v270, %v723
      %725 = vmatprep.subr.mxu0 %v724
      %v726 = vand.u32 %v269, 4294901760
      %v727 = vsub.f32 %v269, %v726
      %728 = vmatpush1.msra.mxu0 %v727
      %729 = vmatprep.subr.mxu0 0.0
      %730 = vmatpush2.msra.mxu0 0.0
      %731 = vmatprep.subr.mxu0 0.0
      %732 = vmatpush2.msra.mxu0 0.0
      %733 = vmatprep.subr.mxu0 0.0
      %734 = vmatpush2.msra.mxu0 0.0
      %735 = vmatprep.subr.mxu0 0.0
      %736 = vmatpush2.msra.mxu0 0.0
      %737 = vmatprep.subr.mxu0 0.0
      %738 = vmatpush2.msra.mxu0 0.0
      %739 = vmatprep.subr.mxu0 0.0
      %740 = vmatpush2.msra.mxu0 0.0
      %741 = vmatprep.subr.mxu0 0.0
      %742 = vmatpush2.msra.mxu0 0.0
      %743 = vmatprep.subr.mxu0 0.0
      %744 = vmatpush2.msra.mxu0 0.0
      %745 = vmatprep.subr.mxu0 0.0
      %746 = vmatpush2.msra.mxu0 0.0
      %747 = vmatprep.subr.mxu0 0.0
      %748 = vmatpush2.msra.mxu0 0.0
      %749 = vmatprep.subr.mxu0 0.0
      %750 = vmatpush2.msra.mxu0 0.0
      %751 = vmatprep.subr.mxu0 0.0
      %752 = vmatpush2.msra.mxu0 0.0
      %753 = vmatprep.subr.mxu0 0.0
      %754 = vmatpush2.msra.mxu0 0.0
      %755 = vmatprep.subr.mxu0 0.0
      %756 = vmatpush2.msra.mxu0 0.0
      %757 = vmatprep.subr.mxu0 0.0
      %758 = vmatpush2.msra.mxu0 0.0
      %759 = vmatprep.subr.mxu0 0.0
      %760 = vmatpush2.msra.mxu0 0.0
      %761 = vmatprep.mubr.f32.mxu0 0.0
      %v762 = vand.u32 %v311, 4294901760
      %v763 = vsub.f32 %v311, %v762
      %764 = vmatmul.mubr.f32.gmra.mxu0 %v763
      %v765 = vpop.f32.mrf.mxu0
      %v766 = vadd.f32 %v634, %v765
      %v767 = vpop.f32.mrf.mxu0
      %v768 = vadd.f32 %v636, %v767
      %769 = vmatprep.mubr.f32.mxu0 0.0
      %v770 = vand.u32 %v314, 4294901760
      %v771 = vsub.f32 %v314, %v770
      %772 = vmatmul.mubr.f32.gmra.mxu0 %v771
      %v773 = vpop.f32.mrf.mxu0
      %v774 = vadd.f32 %v641, %v773
      %v775 = vpop.f32.mrf.mxu0
      %v776 = vadd.f32 %v643, %v775
      %777 = vdwg.mxu0
      %778 = vmatprep.subr.mxu0 0.0
      %779 = vmatpush1.msra.mxu0 0.0
      %780 = vmatprep.subr.mxu0 0.0
      %781 = vmatpush1.msra.mxu0 0.0
      %782 = vmatprep.subr.mxu0 0.0
      %783 = vmatpush1.msra.mxu0 0.0
      %v784 = vand.u32 %v321, 4294901760
      %785 = vmatprep.subr.mxu0 %v784
      %v786 = vand.u32 %v318, 4294901760
      %787 = vmatpush1.msra.mxu0 %v786
      %v788 = vand.u32 %v292, 4294901760
      %789 = vmatprep.subr.mxu0 %v788
      %v790 = vand.u32 %v291, 4294901760
      %791 = vmatpush1.msra.mxu0 %v790
      %v792 = vand.u32 %v290, 4294901760
      %793 = vmatprep.subr.mxu0 %v792
      %v794 = vand.u32 %v289, 4294901760
      %795 = vmatpush1.msra.mxu0 %v794
      %v796 = vand.u32 %v288, 4294901760
      %797 = vmatprep.subr.mxu0 %v796
      %v798 = vand.u32 %v287, 4294901760
      %799 = vmatpush1.msra.mxu0 %v798
      %v800 = vand.u32 %v286, 4294901760
      %801 = vmatprep.subr.mxu0 %v800
      %v802 = vand.u32 %v285, 4294901760
      %803 = vmatpush1.msra.mxu0 %v802
      %v804 = vand.u32 %v284, 4294901760
      %805 = vmatprep.subr.mxu0 %v804
      %v806 = vand.u32 %v283, 4294901760
      %807 = vmatpush1.msra.mxu0 %v806
      %v808 = vand.u32 %v282, 4294901760
      %809 = vmatprep.subr.mxu0 %v808
      %v810 = vand.u32 %v281, 4294901760
      %811 = vmatpush1.msra.mxu0 %v810
      %v812 = vand.u32 %v280, 4294901760
      %813 = vmatprep.subr.mxu0 %v812
      %v814 = vand.u32 %v279, 4294901760
      %815 = vmatpush1.msra.mxu0 %v814
      %v816 = vand.u32 %v278, 4294901760
      %817 = vmatprep.subr.mxu0 %v816
      %v818 = vand.u32 %v277, 4294901760
      %819 = vmatpush1.msra.mxu0 %v818
      %v820 = vand.u32 %v276, 4294901760
      %821 = vmatprep.subr.mxu0 %v820
      %v822 = vand.u32 %v275, 4294901760
      %823 = vmatpush1.msra.mxu0 %v822
      %v824 = vand.u32 %v274, 4294901760
      %825 = vmatprep.subr.mxu0 %v824
      %v826 = vand.u32 %v273, 4294901760
      %827 = vmatpush1.msra.mxu0 %v826
      %v828 = vand.u32 %v272, 4294901760
      %829 = vmatprep.subr.mxu0 %v828
      %v830 = vand.u32 %v271, 4294901760
      %831 = vmatpush1.msra.mxu0 %v830
      %v832 = vand.u32 %v270, 4294901760
      %833 = vmatprep.subr.mxu0 %v832
      %v834 = vand.u32 %v269, 4294901760
      %835 = vmatpush1.msra.mxu0 %v834
      %836 = vmatprep.subr.mxu0 0.0
      %837 = vmatpush2.msra.mxu0 0.0
      %838 = vmatprep.subr.mxu0 0.0
      %839 = vmatpush2.msra.mxu0 0.0
      %840 = vmatprep.subr.mxu0 0.0
      %841 = vmatpush2.msra.mxu0 0.0
      %842 = vmatprep.subr.mxu0 0.0
      %843 = vmatpush2.msra.mxu0 0.0
      %844 = vmatprep.subr.mxu0 0.0
      %845 = vmatpush2.msra.mxu0 0.0
      %846 = vmatprep.subr.mxu0 0.0
      %847 = vmatpush2.msra.mxu0 0.0
      %848 = vmatprep.subr.mxu0 0.0
      %849 = vmatpush2.msra.mxu0 0.0
      %850 = vmatprep.subr.mxu0 0.0
      %851 = vmatpush2.msra.mxu0 0.0
      %852 = vmatprep.subr.mxu0 0.0
      %853 = vmatpush2.msra.mxu0 0.0
      %854 = vmatprep.subr.mxu0 0.0
      %855 = vmatpush2.msra.mxu0 0.0
      %856 = vmatprep.subr.mxu0 0.0
      %857 = vmatpush2.msra.mxu0 0.0
      %858 = vmatprep.subr.mxu0 0.0
      %859 = vmatpush2.msra.mxu0 0.0
      %860 = vmatprep.subr.mxu0 0.0
      %861 = vmatpush2.msra.mxu0 0.0
      %862 = vmatprep.subr.mxu0 0.0
      %863 = vmatpush2.msra.mxu0 0.0
      %864 = vmatprep.subr.mxu0 0.0
      %865 = vmatpush2.msra.mxu0 0.0
      %866 = vmatprep.subr.mxu0 0.0
      %867 = vmatpush2.msra.mxu0 0.0
      %868 = vmatprep.mubr.f32.mxu0 0.0
      %v869 = vand.u32 %v311, 4294901760
      %v870 = vsub.f32 %v311, %v869
      %v871 = vand.u32 %v870, 4294901760
      %872 = vmatmul.mubr.f32.gmra.mxu0 %v871
      %v873 = vpop.f32.mrf.mxu0
      %v874 = vadd.f32 %v766, %v873
      %v875 = vpop.f32.mrf.mxu0
      %v876 = vadd.f32 %v768, %v875
      %877 = vmatprep.mubr.f32.mxu0 0.0
      %v878 = vand.u32 %v314, 4294901760
      %v879 = vsub.f32 %v314, %v878
      %v880 = vand.u32 %v879, 4294901760
      %881 = vmatmul.mubr.f32.gmra.mxu0 %v880
      %v882 = vpop.f32.mrf.mxu0
      %v883 = vadd.f32 %v774, %v882
      %v884 = vpop.f32.mrf.mxu0
      %v885 = vadd.f32 %v776, %v884
      %886 = vdwg.mxu0
      %887 = vmatprep.subr.mxu0 0.0
      %888 = vmatpush1.msra.mxu0 0.0
      %889 = vmatprep.subr.mxu0 0.0
      %890 = vmatpush1.msra.mxu0 0.0
      %891 = vmatprep.subr.mxu0 0.0
      %892 = vmatpush1.msra.mxu0 0.0
      %v893 = vand.u32 %v321, 4294901760
      %v894 = vsub.f32 %v321, %v893
      %v895 = vand.u32 %v894, 4294901760
      %896 = vmatprep.subr.mxu0 %v895
      %v897 = vand.u32 %v318, 4294901760
      %v898 = vsub.f32 %v318, %v897
      %v899 = vand.u32 %v898, 4294901760
      %900 = vmatpush1.msra.mxu0 %v899
      %v901 = vand.u32 %v292, 4294901760
      %v902 = vsub.f32 %v292, %v901
      %v903 = vand.u32 %v902, 4294901760
      %904 = vmatprep.subr.mxu0 %v903
      %v905 = vand.u32 %v291, 4294901760
      %v906 = vsub.f32 %v291, %v905
      %v907 = vand.u32 %v906, 4294901760
      %908 = vmatpush1.msra.mxu0 %v907
      %v909 = vand.u32 %v290, 4294901760
      %v910 = vsub.f32 %v290, %v909
      %v911 = vand.u32 %v910, 4294901760
      %912 = vmatprep.subr.mxu0 %v911
      %v913 = vand.u32 %v289, 4294901760
      %v914 = vsub.f32 %v289, %v913
      %v915 = vand.u32 %v914, 4294901760
      %916 = vmatpush1.msra.mxu0 %v915
      %v917 = vand.u32 %v288, 4294901760
      %v918 = vsub.f32 %v288, %v917
      %v919 = vand.u32 %v918, 4294901760
      %920 = vmatprep.subr.mxu0 %v919
      %v921 = vand.u32 %v287, 4294901760
      %v922 = vsub.f32 %v287, %v921
      %v923 = vand.u32 %v922, 4294901760
      %924 = vmatpush1.msra.mxu0 %v923
      %v925 = vand.u32 %v286, 4294901760
      %v926 = vsub.f32 %v286, %v925
      %v927 = vand.u32 %v926, 4294901760
      %928 = vmatprep.subr.mxu0 %v927
      %v929 = vand.u32 %v285, 4294901760
      %v930 = vsub.f32 %v285, %v929
      %v931 = vand.u32 %v930, 4294901760
      %932 = vmatpush1.msra.mxu0 %v931
      %v933 = vand.u32 %v284, 4294901760
      %v934 = vsub.f32 %v284, %v933
      %v935 = vand.u32 %v934, 4294901760
      %936 = vmatprep.subr.mxu0 %v935
      %v937 = vand.u32 %v283, 4294901760
      %v938 = vsub.f32 %v283, %v937
      %v939 = vand.u32 %v938, 4294901760
      %940 = vmatpush1.msra.mxu0 %v939
      %v941 = vand.u32 %v282, 4294901760
      %v942 = vsub.f32 %v282, %v941
      %v943 = vand.u32 %v942, 4294901760
      %944 = vmatprep.subr.mxu0 %v943
      %v945 = vand.u32 %v281, 4294901760
      %v946 = vsub.f32 %v281, %v945
      %v947 = vand.u32 %v946, 4294901760
      %948 = vmatpush1.msra.mxu0 %v947
      %v949 = vand.u32 %v280, 4294901760
      %v950 = vsub.f32 %v280, %v949
      %v951 = vand.u32 %v950, 4294901760
      %952 = vmatprep.subr.mxu0 %v951
      %v953 = vand.u32 %v279, 4294901760
      %v954 = vsub.f32 %v279, %v953
      %v955 = vand.u32 %v954, 4294901760
      %956 = vmatpush1.msra.mxu0 %v955
      %v957 = vand.u32 %v278, 4294901760
      %v958 = vsub.f32 %v278, %v957
      %v959 = vand.u32 %v958, 4294901760
      %960 = vmatprep.subr.mxu0 %v959
      %v961 = vand.u32 %v277, 4294901760
      %v962 = vsub.f32 %v277, %v961
      %v963 = vand.u32 %v962, 4294901760
      %964 = vmatpush1.msra.mxu0 %v963
      %v965 = vand.u32 %v276, 4294901760
      %v966 = vsub.f32 %v276, %v965
      %v967 = vand.u32 %v966, 4294901760
      %968 = vmatprep.subr.mxu0 %v967
      %v969 = vand.u32 %v275, 4294901760
      %v970 = vsub.f32 %v275, %v969
      %v971 = vand.u32 %v970, 4294901760
      %972 = vmatpush1.msra.mxu0 %v971
      %v973 = vand.u32 %v274, 4294901760
      %v974 = vsub.f32 %v274, %v973
      %v975 = vand.u32 %v974, 4294901760
      %976 = vmatprep.subr.mxu0 %v975
      %v977 = vand.u32 %v273, 4294901760
      %v978 = vsub.f32 %v273, %v977
      %v979 = vand.u32 %v978, 4294901760
      %980 = vmatpush1.msra.mxu0 %v979
      %v981 = vand.u32 %v272, 4294901760
      %v982 = vsub.f32 %v272, %v981
      %v983 = vand.u32 %v982, 4294901760
      %984 = vmatprep.subr.mxu0 %v983
      %v985 = vand.u32 %v271, 4294901760
      %v986 = vsub.f32 %v271, %v985
      %v987 = vand.u32 %v986, 4294901760
      %988 = vmatpush1.msra.mxu0 %v987
      %v989 = vand.u32 %v270, 4294901760
      %v990 = vsub.f32 %v270, %v989
      %v991 = vand.u32 %v990, 4294901760
      %992 = vmatprep.subr.mxu0 %v991
      %v993 = vand.u32 %v269, 4294901760
      %v994 = vsub.f32 %v269, %v993
      %v995 = vand.u32 %v994, 4294901760
      %996 = vmatpush1.msra.mxu0 %v995
      %997 = vmatprep.subr.mxu0 0.0
      %998 = vmatpush2.msra.mxu0 0.0
      %999 = vmatprep.subr.mxu0 0.0
      %1000 = vmatpush2.msra.mxu0 0.0
      %1001 = vmatprep.subr.mxu0 0.0
      %1002 = vmatpush2.msra.mxu0 0.0
      %1003 = vmatprep.subr.mxu0 0.0
      %1004 = vmatpush2.msra.mxu0 0.0
      %1005 = vmatprep.subr.mxu0 0.0
      %1006 = vmatpush2.msra.mxu0 0.0
      %1007 = vmatprep.subr.mxu0 0.0
      %1008 = vmatpush2.msra.mxu0 0.0
      %1009 = vmatprep.subr.mxu0 0.0
      %1010 = vmatpush2.msra.mxu0 0.0
      %1011 = vmatprep.subr.mxu0 0.0
      %1012 = vmatpush2.msra.mxu0 0.0
      %1013 = vmatprep.subr.mxu0 0.0
      %1014 = vmatpush2.msra.mxu0 0.0
      %1015 = vmatprep.subr.mxu0 0.0
      %1016 = vmatpush2.msra.mxu0 0.0
      %1017 = vmatprep.subr.mxu0 0.0
      %1018 = vmatpush2.msra.mxu0 0.0
      %1019 = vmatprep.subr.mxu0 0.0
      %1020 = vmatpush2.msra.mxu0 0.0
      %1021 = vmatprep.subr.mxu0 0.0
      %1022 = vmatpush2.msra.mxu0 0.0
      %1023 = vmatprep.subr.mxu0 0.0
      %1024 = vmatpush2.msra.mxu0 0.0
      %1025 = vmatprep.subr.mxu0 0.0
      %1026 = vmatpush2.msra.mxu0 0.0
      %1027 = vmatprep.subr.mxu0 0.0
      %1028 = vmatpush2.msra.mxu0 0.0
      %1029 = vmatprep.mubr.f32.mxu0 0.0
      %v1030 = vand.u32 %v311, 4294901760
      %1031 = vmatmul.mubr.f32.gmra.mxu0 %v1030
      %v1032 = vpop.f32.mrf.mxu0
      %v1033 = vadd.f32 %v874, %v1032
      %v1034 = vpop.f32.mrf.mxu0
      %v1035 = vadd.f32 %v876, %v1034
      %1036 = vmatprep.mubr.f32.mxu0 0.0
      %v1037 = vand.u32 %v314, 4294901760
      %1038 = vmatmul.mubr.f32.gmra.mxu0 %v1037
      %v1039 = vpop.f32.mrf.mxu0
      %v1040 = vadd.f32 %v883, %v1039
      %v1041 = vpop.f32.mrf.mxu0
      %v1042 = vadd.f32 %v885, %v1041
      %1043 = vdwg.mxu0
      %1044 = vmatprep.subr.mxu0 0.0
      %1045 = vmatpush1.msra.mxu0 0.0
      %1046 = vmatprep.subr.mxu0 0.0
      %1047 = vmatpush1.msra.mxu0 0.0
      %1048 = vmatprep.subr.mxu0 0.0
      %1049 = vmatpush1.msra.mxu0 0.0
      %v1050 = vand.u32 %v321, 4294901760
      %1051 = vmatprep.subr.mxu0 %v1050
      %v1052 = vand.u32 %v318, 4294901760
      %1053 = vmatpush1.msra.mxu0 %v1052
      %v1054 = vand.u32 %v292, 4294901760
      %1055 = vmatprep.subr.mxu0 %v1054
      %v1056 = vand.u32 %v291, 4294901760
      %1057 = vmatpush1.msra.mxu0 %v1056
      %v1058 = vand.u32 %v290, 4294901760
      %1059 = vmatprep.subr.mxu0 %v1058
      %v1060 = vand.u32 %v289, 4294901760
      %1061 = vmatpush1.msra.mxu0 %v1060
      %v1062 = vand.u32 %v288, 4294901760
      %1063 = vmatprep.subr.mxu0 %v1062
      %v1064 = vand.u32 %v287, 4294901760
      %1065 = vmatpush1.msra.mxu0 %v1064
      %v1066 = vand.u32 %v286, 4294901760
      %1067 = vmatprep.subr.mxu0 %v1066
      %v1068 = vand.u32 %v285, 4294901760
      %1069 = vmatpush1.msra.mxu0 %v1068
      %v1070 = vand.u32 %v284, 4294901760
      %1071 = vmatprep.subr.mxu0 %v1070
      %v1072 = vand.u32 %v283, 4294901760
      %1073 = vmatpush1.msra.mxu0 %v1072
      %v1074 = vand.u32 %v282, 4294901760
      %1075 = vmatprep.subr.mxu0 %v1074
      %v1076 = vand.u32 %v281, 4294901760
      %1077 = vmatpush1.msra.mxu0 %v1076
      %v1078 = vand.u32 %v280, 4294901760
      %1079 = vmatprep.subr.mxu0 %v1078
      %v1080 = vand.u32 %v279, 4294901760
      %1081 = vmatpush1.msra.mxu0 %v1080
      %v1082 = vand.u32 %v278, 4294901760
      %1083 = vmatprep.subr.mxu0 %v1082
      %v1084 = vand.u32 %v277, 4294901760
      %1085 = vmatpush1.msra.mxu0 %v1084
      %v1086 = vand.u32 %v276, 4294901760
      %1087 = vmatprep.subr.mxu0 %v1086
      %v1088 = vand.u32 %v275, 4294901760
      %1089 = vmatpush1.msra.mxu0 %v1088
      %v1090 = vand.u32 %v274, 4294901760
      %1091 = vmatprep.subr.mxu0 %v1090
      %v1092 = vand.u32 %v273, 4294901760
      %1093 = vmatpush1.msra.mxu0 %v1092
      %v1094 = vand.u32 %v272, 4294901760
      %1095 = vmatprep.subr.mxu0 %v1094
      %v1096 = vand.u32 %v271, 4294901760
      %1097 = vmatpush1.msra.mxu0 %v1096
      %v1098 = vand.u32 %v270, 4294901760
      %1099 = vmatprep.subr.mxu0 %v1098
      %v1100 = vand.u32 %v269, 4294901760
      %1101 = vmatpush1.msra.mxu0 %v1100
      %1102 = vmatprep.subr.mxu0 0.0
      %1103 = vmatpush2.msra.mxu0 0.0
      %1104 = vmatprep.subr.mxu0 0.0
      %1105 = vmatpush2.msra.mxu0 0.0
      %1106 = vmatprep.subr.mxu0 0.0
      %1107 = vmatpush2.msra.mxu0 0.0
      %1108 = vmatprep.subr.mxu0 0.0
      %1109 = vmatpush2.msra.mxu0 0.0
      %1110 = vmatprep.subr.mxu0 0.0
      %1111 = vmatpush2.msra.mxu0 0.0
      %1112 = vmatprep.subr.mxu0 0.0
      %1113 = vmatpush2.msra.mxu0 0.0
      %1114 = vmatprep.subr.mxu0 0.0
      %1115 = vmatpush2.msra.mxu0 0.0
      %1116 = vmatprep.subr.mxu0 0.0
      %1117 = vmatpush2.msra.mxu0 0.0
      %1118 = vmatprep.subr.mxu0 0.0
      %1119 = vmatpush2.msra.mxu0 0.0
      %1120 = vmatprep.subr.mxu0 0.0
      %1121 = vmatpush2.msra.mxu0 0.0
      %1122 = vmatprep.subr.mxu0 0.0
      %1123 = vmatpush2.msra.mxu0 0.0
      %1124 = vmatprep.subr.mxu0 0.0
      %1125 = vmatpush2.msra.mxu0 0.0
      %1126 = vmatprep.subr.mxu0 0.0
      %1127 = vmatpush2.msra.mxu0 0.0
      %1128 = vmatprep.subr.mxu0 0.0
      %1129 = vmatpush2.msra.mxu0 0.0
      %1130 = vmatprep.subr.mxu0 0.0
      %1131 = vmatpush2.msra.mxu0 0.0
      %1132 = vmatprep.subr.mxu0 0.0
      %1133 = vmatpush2.msra.mxu0 0.0
      %1134 = vmatprep.mubr.f32.mxu0 0.0
      %v1135 = vand.u32 %v311, 4294901760
      %1136 = vmatmul.mubr.f32.gmra.mxu0 %v1135
      %v1137 = vpop.f32.mrf.mxu0
      %v1138 = vadd.f32 %v1033, %v1137
      %v1139 = vpop.f32.mrf.mxu0
      %v1140 = vadd.f32 %v1035, %v1139
      %1141 = vmatprep.mubr.f32.mxu0 0.0
      %v1142 = vand.u32 %v314, 4294901760
      %1143 = vmatmul.mubr.f32.gmra.mxu0 %v1142
      %v1144 = vpop.f32.mrf.mxu0
      %v1145 = vadd.f32 %v1040, %v1144
      %v1146 = vpop.f32.mrf.mxu0
      %v1147 = vadd.f32 %v1042, %v1146
      %1148 = vdwg.mxu0
      %vm1149 = vcmp.ge.f32.partialorder %v1138, 0.0
      %vm1150 = vcmp.ge.f32.partialorder %v1140, 0.0
      %vm1151 = vcmp.ge.f32.partialorder %v1145, 0.0
      %vm1152 = vcmp.ge.f32.partialorder %v1147, 0.0
      %v1153 = vmul.f32 %v1138, 0.01
      %v1154 = vmul.f32 %v1140, 0.01
      %v1155 = vmul.f32 %v1145, 0.01
      %v1156 = vmul.f32 %v1147, 0.01
      %v1157 = vsel %vm1149, %v1138, %v1153
      %v1158 = vsel %vm1150, %v1140, %v1154
      %v1159 = vsel %vm1151, %v1145, %v1155
      %v1160 = vsel %vm1152, %v1147, %v1156
      %v1163 = vrot.slane %v281, 4
      %v1164 = vrot.slane %v282, 4
      %v1167 = vsel %vm316, %v281, %v1163
      %v1168 = vsel %vm316, %v282, %v1164
      %v1169 = vadd.f32 %v1157, %v1167
      %v1170 = vadd.f32 %v1158, %v1168
      %v1171 = vadd.f32 %v1159, %v281
      %v1172 = vadd.f32 %v1160, %v282
      %v1173 = vld [vmem:[%s263] sm:$0xff]
      %v1174 = vld [vmem:[%s4] sm:$0xff]
      %v1175 = vld [vmem:[%s4 + $0x8] sm:$0xff]
      %v1176 = vld [vmem:[%s4 + $0x10] sm:$0xff]
      %v1177 = vld [vmem:[%s4 + $0x18] sm:$0xff]
      %v1178 = vld [vmem:[%s5] sm:$0x1]
      %v1180 = vlaneseq
      %v1181 = vshrl.u32 %v1180, 7
      %v1182 = vsub.s32 0, %v1181
      %v1183 = vrot.slane %v1178, %v1182
      %vm1185 = vcmask 261120
      %v1187 = vsel %vm1185, %v1173, 0
      %1189 = vmatprep.subr.mxu0 0.0
      %1190 = vmatpush1.msra.mxu0 0.0
      %1191 = vmatprep.subr.mxu0 0.0
      %1192 = vmatpush1.msra.mxu0 0.0
      %1193 = vmatprep.subr.mxu0 0.0
      %1194 = vmatpush1.msra.mxu0 0.0
      %1195 = vmatprep.subr.mxu0 0.0
      %1196 = vmatpush1.msra.mxu0 0.0
      %1197 = vmatprep.subr.mxu0 0.0
      %1198 = vmatpush1.msra.mxu0 0.0
      %1199 = vmatprep.subr.mxu0 0.0
      %1200 = vmatpush1.msra.mxu0 0.0
      %1201 = vmatprep.subr.mxu0 0.0
      %1202 = vmatpush1.msra.mxu0 0.0
      %1203 = vmatprep.subr.mxu0 0.0
      %1204 = vmatpush1.msra.mxu0 0.0
      %1205 = vmatprep.subr.mxu0 0.0
      %1206 = vmatpush1.msra.mxu0 0.0
      %1207 = vmatprep.subr.mxu0 0.0
      %1208 = vmatpush1.msra.mxu0 0.0
      %1209 = vmatprep.subr.mxu0 0.0
      %1210 = vmatpush1.msra.mxu0 0.0
      %1211 = vmatprep.subr.mxu0 0.0
      %1212 = vmatpush1.msra.mxu0 0.0
      %1213 = vmatprep.subr.mxu0 0.0
      %v1214 = vand.u32 %v1177, 4294901760
      %1215 = vmatpush1.msra.mxu0 %v1214
      %1216 = vmatprep.subr.mxu0 0.0
      %v1217 = vand.u32 %v1176, 4294901760
      %1218 = vmatpush1.msra.mxu0 %v1217
      %1219 = vmatprep.subr.mxu0 0.0
      %v1220 = vand.u32 %v1175, 4294901760
      %1221 = vmatpush1.msra.mxu0 %v1220
      %1222 = vmatprep.subr.mxu0 0.0
      %v1223 = vand.u32 %v1174, 4294901760
      %1224 = vmatpush1.msra.mxu0 %v1223
      %1225 = vmatprep.subr.mxu0 0.0
      %1226 = vmatpush2.msra.mxu0 0.0
      %1227 = vmatprep.subr.mxu0 0.0
      %1228 = vmatpush2.msra.mxu0 0.0
      %1229 = vmatprep.subr.mxu0 0.0
      %1230 = vmatpush2.msra.mxu0 0.0
      %1231 = vmatprep.subr.mxu0 0.0
      %1232 = vmatpush2.msra.mxu0 0.0
      %1233 = vmatprep.subr.mxu0 0.0
      %1234 = vmatpush2.msra.mxu0 0.0
      %1235 = vmatprep.subr.mxu0 0.0
      %1236 = vmatpush2.msra.mxu0 0.0
      %1237 = vmatprep.subr.mxu0 0.0
      %1238 = vmatpush2.msra.mxu0 0.0
      %1239 = vmatprep.subr.mxu0 0.0
      %1240 = vmatpush2.msra.mxu0 0.0
      %1241 = vmatprep.subr.mxu0 0.0
      %1242 = vmatpush2.msra.mxu0 0.0
      %1243 = vmatprep.subr.mxu0 0.0
      %1244 = vmatpush2.msra.mxu0 0.0
      %1245 = vmatprep.subr.mxu0 0.0
      %1246 = vmatpush2.msra.mxu0 0.0
      %1247 = vmatprep.subr.mxu0 0.0
      %1248 = vmatpush2.msra.mxu0 0.0
      %1249 = vmatprep.subr.mxu0 0.0
      %1250 = vmatpush2.msra.mxu0 0.0
      %1251 = vmatprep.subr.mxu0 0.0
      %1252 = vmatpush2.msra.mxu0 0.0
      %1253 = vmatprep.subr.mxu0 0.0
      %1254 = vmatpush2.msra.mxu0 0.0
      %1255 = vmatprep.subr.mxu0 0.0
      %1256 = vmatpush2.msra.mxu0 0.0
      %1257 = vmatprep.mubr.f32.mxu0 0.0
      %v1258 = vand.u32 %v1187, 4294901760
      %v1259 = vsub.f32 %v1187, %v1258
      %v1260 = vand.u32 %v1259, 4294901760
      %v1261 = vsub.f32 %v1259, %v1260
      %v1262 = vand.u32 %v1261, 4294901760
      %1263 = vmatmul.mubr.f32.gmra.mxu0 %v1262
      %v1264 = vpop.f32.mrf.mxu0
      %v1265 = vadd.f32 %v1183, %v1264
      %v1266 = vpop.f32.mrf.mxu0
      %1267 = vdwg.mxu0
      %1268 = vmatprep.subr.mxu0 0.0
      %1269 = vmatpush1.msra.mxu0 0.0
      %1270 = vmatprep.subr.mxu0 0.0
      %1271 = vmatpush1.msra.mxu0 0.0
      %1272 = vmatprep.subr.mxu0 0.0
      %1273 = vmatpush1.msra.mxu0 0.0
      %1274 = vmatprep.subr.mxu0 0.0
      %1275 = vmatpush1.msra.mxu0 0.0
      %1276 = vmatprep.subr.mxu0 0.0
      %1277 = vmatpush1.msra.mxu0 0.0
      %1278 = vmatprep.subr.mxu0 0.0
      %1279 = vmatpush1.msra.mxu0 0.0
      %1280 = vmatprep.subr.mxu0 0.0
      %1281 = vmatpush1.msra.mxu0 0.0
      %1282 = vmatprep.subr.mxu0 0.0
      %1283 = vmatpush1.msra.mxu0 0.0
      %1284 = vmatprep.subr.mxu0 0.0
      %1285 = vmatpush1.msra.mxu0 0.0
      %1286 = vmatprep.subr.mxu0 0.0
      %1287 = vmatpush1.msra.mxu0 0.0
      %1288 = vmatprep.subr.mxu0 0.0
      %1289 = vmatpush1.msra.mxu0 0.0
      %1290 = vmatprep.subr.mxu0 0.0
      %1291 = vmatpush1.msra.mxu0 0.0
      %1292 = vmatprep.subr.mxu0 0.0
      %v1293 = vand.u32 %v1177, 4294901760
      %v1294 = vsub.f32 %v1177, %v1293
      %v1295 = vand.u32 %v1294, 4294901760
      %v1296 = vsub.f32 %v1294, %v1295
      %v1297 = vand.u32 %v1296, 4294901760
      %1298 = vmatpush1.msra.mxu0 %v1297
      %1299 = vmatprep.subr.mxu0 0.0
      %v1300 = vand.u32 %v1176, 4294901760
      %v1301 = vsub.f32 %v1176, %v1300
      %v1302 = vand.u32 %v1301, 4294901760
      %v1303 = vsub.f32 %v1301, %v1302
      %v1304 = vand.u32 %v1303, 4294901760
      %1305 = vmatpush1.msra.mxu0 %v1304
      %1306 = vmatprep.subr.mxu0 0.0
      %v1307 = vand.u32 %v1175, 4294901760
      %v1308 = vsub.f32 %v1175, %v1307
      %v1309 = vand.u32 %v1308, 4294901760
      %v1310 = vsub.f32 %v1308, %v1309
      %v1311 = vand.u32 %v1310, 4294901760
      %1312 = vmatpush1.msra.mxu0 %v1311
      %1313 = vmatprep.subr.mxu0 0.0
      %v1314 = vand.u32 %v1174, 4294901760
      %v1315 = vsub.f32 %v1174, %v1314
      %v1316 = vand.u32 %v1315, 4294901760
      %v1317 = vsub.f32 %v1315, %v1316
      %v1318 = vand.u32 %v1317, 4294901760
      %1319 = vmatpush1.msra.mxu0 %v1318
      %1320 = vmatprep.subr.mxu0 0.0
      %1321 = vmatpush2.msra.mxu0 0.0
      %1322 = vmatprep.subr.mxu0 0.0
      %1323 = vmatpush2.msra.mxu0 0.0
      %1324 = vmatprep.subr.mxu0 0.0
      %1325 = vmatpush2.msra.mxu0 0.0
      %1326 = vmatprep.subr.mxu0 0.0
      %1327 = vmatpush2.msra.mxu0 0.0
      %1328 = vmatprep.subr.mxu0 0.0
      %1329 = vmatpush2.msra.mxu0 0.0
      %1330 = vmatprep.subr.mxu0 0.0
      %1331 = vmatpush2.msra.mxu0 0.0
      %1332 = vmatprep.subr.mxu0 0.0
      %1333 = vmatpush2.msra.mxu0 0.0
      %1334 = vmatprep.subr.mxu0 0.0
      %1335 = vmatpush2.msra.mxu0 0.0
      %1336 = vmatprep.subr.mxu0 0.0
      %1337 = vmatpush2.msra.mxu0 0.0
      %1338 = vmatprep.subr.mxu0 0.0
      %1339 = vmatpush2.msra.mxu0 0.0
      %1340 = vmatprep.subr.mxu0 0.0
      %1341 = vmatpush2.msra.mxu0 0.0
      %1342 = vmatprep.subr.mxu0 0.0
      %1343 = vmatpush2.msra.mxu0 0.0
      %1344 = vmatprep.subr.mxu0 0.0
      %1345 = vmatpush2.msra.mxu0 0.0
      %1346 = vmatprep.subr.mxu0 0.0
      %1347 = vmatpush2.msra.mxu0 0.0
      %1348 = vmatprep.subr.mxu0 0.0
      %1349 = vmatpush2.msra.mxu0 0.0
      %1350 = vmatprep.subr.mxu0 0.0
      %1351 = vmatpush2.msra.mxu0 0.0
      %1352 = vmatprep.mubr.f32.mxu0 0.0
      %v1353 = vand.u32 %v1187, 4294901760
      %1354 = vmatmul.mubr.f32.gmra.mxu0 %v1353
      %v1355 = vpop.f32.mrf.mxu0
      %v1356 = vadd.f32 %v1265, %v1355
      %v1357 = vpop.f32.mrf.mxu0
      %1358 = vdwg.mxu0
      %1359 = vmatprep.subr.mxu0 0.0
      %1360 = vmatpush1.msra.mxu0 0.0
      %1361 = vmatprep.subr.mxu0 0.0
      %1362 = vmatpush1.msra.mxu0 0.0
      %1363 = vmatprep.subr.mxu0 0.0
      %1364 = vmatpush1.msra.mxu0 0.0
      %1365 = vmatprep.subr.mxu0 0.0
      %1366 = vmatpush1.msra.mxu0 0.0
      %1367 = vmatprep.subr.mxu0 0.0
      %1368 = vmatpush1.msra.mxu0 0.0
      %1369 = vmatprep.subr.mxu0 0.0
      %1370 = vmatpush1.msra.mxu0 0.0
      %1371 = vmatprep.subr.mxu0 0.0
      %1372 = vmatpush1.msra.mxu0 0.0
      %1373 = vmatprep.subr.mxu0 0.0
      %1374 = vmatpush1.msra.mxu0 0.0
      %1375 = vmatprep.subr.mxu0 0.0
      %1376 = vmatpush1.msra.mxu0 0.0
      %1377 = vmatprep.subr.mxu0 0.0
      %1378 = vmatpush1.msra.mxu0 0.0
      %1379 = vmatprep.subr.mxu0 0.0
      %1380 = vmatpush1.msra.mxu0 0.0
      %1381 = vmatprep.subr.mxu0 0.0
      %1382 = vmatpush1.msra.mxu0 0.0
      %1383 = vmatprep.subr.mxu0 0.0
      %v1384 = vand.u32 %v1177, 4294901760
      %v1385 = vsub.f32 %v1177, %v1384
      %1386 = vmatpush1.msra.mxu0 %v1385
      %1387 = vmatprep.subr.mxu0 0.0
      %v1388 = vand.u32 %v1176, 4294901760
      %v1389 = vsub.f32 %v1176, %v1388
      %1390 = vmatpush1.msra.mxu0 %v1389
      %1391 = vmatprep.subr.mxu0 0.0
      %v1392 = vand.u32 %v1175, 4294901760
      %v1393 = vsub.f32 %v1175, %v1392
      %1394 = vmatpush1.msra.mxu0 %v1393
      %1395 = vmatprep.subr.mxu0 0.0
      %v1396 = vand.u32 %v1174, 4294901760
      %v1397 = vsub.f32 %v1174, %v1396
      %1398 = vmatpush1.msra.mxu0 %v1397
      %1399 = vmatprep.subr.mxu0 0.0
      %1400 = vmatpush2.msra.mxu0 0.0
      %1401 = vmatprep.subr.mxu0 0.0
      %1402 = vmatpush2.msra.mxu0 0.0
      %1403 = vmatprep.subr.mxu0 0.0
      %1404 = vmatpush2.msra.mxu0 0.0
      %1405 = vmatprep.subr.mxu0 0.0
      %1406 = vmatpush2.msra.mxu0 0.0
      %1407 = vmatprep.subr.mxu0 0.0
      %1408 = vmatpush2.msra.mxu0 0.0
      %1409 = vmatprep.subr.mxu0 0.0
      %1410 = vmatpush2.msra.mxu0 0.0
      %1411 = vmatprep.subr.mxu0 0.0
      %1412 = vmatpush2.msra.mxu0 0.0
      %1413 = vmatprep.subr.mxu0 0.0
      %1414 = vmatpush2.msra.mxu0 0.0
      %1415 = vmatprep.subr.mxu0 0.0
      %1416 = vmatpush2.msra.mxu0 0.0
      %1417 = vmatprep.subr.mxu0 0.0
      %1418 = vmatpush2.msra.mxu0 0.0
      %1419 = vmatprep.subr.mxu0 0.0
      %1420 = vmatpush2.msra.mxu0 0.0
      %1421 = vmatprep.subr.mxu0 0.0
      %1422 = vmatpush2.msra.mxu0 0.0
      %1423 = vmatprep.subr.mxu0 0.0
      %1424 = vmatpush2.msra.mxu0 0.0
      %1425 = vmatprep.subr.mxu0 0.0
      %1426 = vmatpush2.msra.mxu0 0.0
      %1427 = vmatprep.subr.mxu0 0.0
      %1428 = vmatpush2.msra.mxu0 0.0
      %1429 = vmatprep.subr.mxu0 0.0
      %1430 = vmatpush2.msra.mxu0 0.0
      %1431 = vmatprep.mubr.f32.mxu0 0.0
      %v1432 = vand.u32 %v1187, 4294901760
      %v1433 = vsub.f32 %v1187, %v1432
      %1434 = vmatmul.mubr.f32.gmra.mxu0 %v1433
      %v1435 = vpop.f32.mrf.mxu0
      %v1436 = vadd.f32 %v1356, %v1435
      %v1437 = vpop.f32.mrf.mxu0
      %1438 = vdwg.mxu0
      %1439 = vmatprep.subr.mxu0 0.0
      %1440 = vmatpush1.msra.mxu0 0.0
      %1441 = vmatprep.subr.mxu0 0.0
      %1442 = vmatpush1.msra.mxu0 0.0
      %1443 = vmatprep.subr.mxu0 0.0
      %1444 = vmatpush1.msra.mxu0 0.0
      %1445 = vmatprep.subr.mxu0 0.0
      %1446 = vmatpush1.msra.mxu0 0.0
      %1447 = vmatprep.subr.mxu0 0.0
      %1448 = vmatpush1.msra.mxu0 0.0
      %1449 = vmatprep.subr.mxu0 0.0
      %1450 = vmatpush1.msra.mxu0 0.0
      %1451 = vmatprep.subr.mxu0 0.0
      %1452 = vmatpush1.msra.mxu0 0.0
      %1453 = vmatprep.subr.mxu0 0.0
      %1454 = vmatpush1.msra.mxu0 0.0
      %1455 = vmatprep.subr.mxu0 0.0
      %1456 = vmatpush1.msra.mxu0 0.0
      %1457 = vmatprep.subr.mxu0 0.0
      %1458 = vmatpush1.msra.mxu0 0.0
      %1459 = vmatprep.subr.mxu0 0.0
      %1460 = vmatpush1.msra.mxu0 0.0
      %1461 = vmatprep.subr.mxu0 0.0
      %1462 = vmatpush1.msra.mxu0 0.0
      %1463 = vmatprep.subr.mxu0 0.0
      %v1464 = vand.u32 %v1177, 4294901760
      %1465 = vmatpush1.msra.mxu0 %v1464
      %1466 = vmatprep.subr.mxu0 0.0
      %v1467 = vand.u32 %v1176, 4294901760
      %1468 = vmatpush1.msra.mxu0 %v1467
      %1469 = vmatprep.subr.mxu0 0.0
      %v1470 = vand.u32 %v1175, 4294901760
      %1471 = vmatpush1.msra.mxu0 %v1470
      %1472 = vmatprep.subr.mxu0 0.0
      %v1473 = vand.u32 %v1174, 4294901760
      %1474 = vmatpush1.msra.mxu0 %v1473
      %1475 = vmatprep.subr.mxu0 0.0
      %1476 = vmatpush2.msra.mxu0 0.0
      %1477 = vmatprep.subr.mxu0 0.0
      %1478 = vmatpush2.msra.mxu0 0.0
      %1479 = vmatprep.subr.mxu0 0.0
      %1480 = vmatpush2.msra.mxu0 0.0
      %1481 = vmatprep.subr.mxu0 0.0
      %1482 = vmatpush2.msra.mxu0 0.0
      %1483 = vmatprep.subr.mxu0 0.0
      %1484 = vmatpush2.msra.mxu0 0.0
      %1485 = vmatprep.subr.mxu0 0.0
      %1486 = vmatpush2.msra.mxu0 0.0
      %1487 = vmatprep.subr.mxu0 0.0
      %1488 = vmatpush2.msra.mxu0 0.0
      %1489 = vmatprep.subr.mxu0 0.0
      %1490 = vmatpush2.msra.mxu0 0.0
      %1491 = vmatprep.subr.mxu0 0.0
      %1492 = vmatpush2.msra.mxu0 0.0
      %1493 = vmatprep.subr.mxu0 0.0
      %1494 = vmatpush2.msra.mxu0 0.0
      %1495 = vmatprep.subr.mxu0 0.0
      %1496 = vmatpush2.msra.mxu0 0.0
      %1497 = vmatprep.subr.mxu0 0.0
      %1498 = vmatpush2.msra.mxu0 0.0
      %1499 = vmatprep.subr.mxu0 0.0
      %1500 = vmatpush2.msra.mxu0 0.0
      %1501 = vmatprep.subr.mxu0 0.0
      %1502 = vmatpush2.msra.mxu0 0.0
      %1503 = vmatprep.subr.mxu0 0.0
      %1504 = vmatpush2.msra.mxu0 0.0
      %1505 = vmatprep.subr.mxu0 0.0
      %1506 = vmatpush2.msra.mxu0 0.0
      %1507 = vmatprep.mubr.f32.mxu0 0.0
      %v1508 = vand.u32 %v1187, 4294901760
      %v1509 = vsub.f32 %v1187, %v1508
      %v1510 = vand.u32 %v1509, 4294901760
      %1511 = vmatmul.mubr.f32.gmra.mxu0 %v1510
      %v1512 = vpop.f32.mrf.mxu0
      %v1513 = vadd.f32 %v1436, %v1512
      %v1514 = vpop.f32.mrf.mxu0
      %1515 = vdwg.mxu0
      %1516 = vmatprep.subr.mxu0 0.0
      %1517 = vmatpush1.msra.mxu0 0.0
      %1518 = vmatprep.subr.mxu0 0.0
      %1519 = vmatpush1.msra.mxu0 0.0
      %1520 = vmatprep.subr.mxu0 0.0
      %1521 = vmatpush1.msra.mxu0 0.0
      %1522 = vmatprep.subr.mxu0 0.0
      %1523 = vmatpush1.msra.mxu0 0.0
      %1524 = vmatprep.subr.mxu0 0.0
      %1525 = vmatpush1.msra.mxu0 0.0
      %1526 = vmatprep.subr.mxu0 0.0
      %1527 = vmatpush1.msra.mxu0 0.0
      %1528 = vmatprep.subr.mxu0 0.0
      %1529 = vmatpush1.msra.mxu0 0.0
      %1530 = vmatprep.subr.mxu0 0.0
      %1531 = vmatpush1.msra.mxu0 0.0
      %1532 = vmatprep.subr.mxu0 0.0
      %1533 = vmatpush1.msra.mxu0 0.0
      %1534 = vmatprep.subr.mxu0 0.0
      %1535 = vmatpush1.msra.mxu0 0.0
      %1536 = vmatprep.subr.mxu0 0.0
      %1537 = vmatpush1.msra.mxu0 0.0
      %1538 = vmatprep.subr.mxu0 0.0
      %1539 = vmatpush1.msra.mxu0 0.0
      %1540 = vmatprep.subr.mxu0 0.0
      %v1541 = vand.u32 %v1177, 4294901760
      %v1542 = vsub.f32 %v1177, %v1541
      %v1543 = vand.u32 %v1542, 4294901760
      %1544 = vmatpush1.msra.mxu0 %v1543
      %1545 = vmatprep.subr.mxu0 0.0
      %v1546 = vand.u32 %v1176, 4294901760
      %v1547 = vsub.f32 %v1176, %v1546
      %v1548 = vand.u32 %v1547, 4294901760
      %1549 = vmatpush1.msra.mxu0 %v1548
      %1550 = vmatprep.subr.mxu0 0.0
      %v1551 = vand.u32 %v1175, 4294901760
      %v1552 = vsub.f32 %v1175, %v1551
      %v1553 = vand.u32 %v1552, 4294901760
      %1554 = vmatpush1.msra.mxu0 %v1553
      %1555 = vmatprep.subr.mxu0 0.0
      %v1556 = vand.u32 %v1174, 4294901760
      %v1557 = vsub.f32 %v1174, %v1556
      %v1558 = vand.u32 %v1557, 4294901760
      %1559 = vmatpush1.msra.mxu0 %v1558
      %1560 = vmatprep.subr.mxu0 0.0
      %1561 = vmatpush2.msra.mxu0 0.0
      %1562 = vmatprep.subr.mxu0 0.0
      %1563 = vmatpush2.msra.mxu0 0.0
      %1564 = vmatprep.subr.mxu0 0.0
      %1565 = vmatpush2.msra.mxu0 0.0
      %1566 = vmatprep.subr.mxu0 0.0
      %1567 = vmatpush2.msra.mxu0 0.0
      %1568 = vmatprep.subr.mxu0 0.0
      %1569 = vmatpush2.msra.mxu0 0.0
      %1570 = vmatprep.subr.mxu0 0.0
      %1571 = vmatpush2.msra.mxu0 0.0
      %1572 = vmatprep.subr.mxu0 0.0
      %1573 = vmatpush2.msra.mxu0 0.0
      %1574 = vmatprep.subr.mxu0 0.0
      %1575 = vmatpush2.msra.mxu0 0.0
      %1576 = vmatprep.subr.mxu0 0.0
      %1577 = vmatpush2.msra.mxu0 0.0
      %1578 = vmatprep.subr.mxu0 0.0
      %1579 = vmatpush2.msra.mxu0 0.0
      %1580 = vmatprep.subr.mxu0 0.0
      %1581 = vmatpush2.msra.mxu0 0.0
      %1582 = vmatprep.subr.mxu0 0.0
      %1583 = vmatpush2.msra.mxu0 0.0
      %1584 = vmatprep.subr.mxu0 0.0
      %1585 = vmatpush2.msra.mxu0 0.0
      %1586 = vmatprep.subr.mxu0 0.0
      %1587 = vmatpush2.msra.mxu0 0.0
      %1588 = vmatprep.subr.mxu0 0.0
      %1589 = vmatpush2.msra.mxu0 0.0
      %1590 = vmatprep.subr.mxu0 0.0
      %1591 = vmatpush2.msra.mxu0 0.0
      %1592 = vmatprep.mubr.f32.mxu0 0.0
      %v1593 = vand.u32 %v1187, 4294901760
      %1594 = vmatmul.mubr.f32.gmra.mxu0 %v1593
      %v1595 = vpop.f32.mrf.mxu0
      %v1596 = vadd.f32 %v1513, %v1595
      %v1597 = vpop.f32.mrf.mxu0
      %1598 = vdwg.mxu0
      %1599 = vmatprep.subr.mxu0 0.0
      %1600 = vmatpush1.msra.mxu0 0.0
      %1601 = vmatprep.subr.mxu0 0.0
      %1602 = vmatpush1.msra.mxu0 0.0
      %1603 = vmatprep.subr.mxu0 0.0
      %1604 = vmatpush1.msra.mxu0 0.0
      %1605 = vmatprep.subr.mxu0 0.0
      %1606 = vmatpush1.msra.mxu0 0.0
      %1607 = vmatprep.subr.mxu0 0.0
      %1608 = vmatpush1.msra.mxu0 0.0
      %1609 = vmatprep.subr.mxu0 0.0
      %1610 = vmatpush1.msra.mxu0 0.0
      %1611 = vmatprep.subr.mxu0 0.0
      %1612 = vmatpush1.msra.mxu0 0.0
      %1613 = vmatprep.subr.mxu0 0.0
      %1614 = vmatpush1.msra.mxu0 0.0
      %1615 = vmatprep.subr.mxu0 0.0
      %1616 = vmatpush1.msra.mxu0 0.0
      %1617 = vmatprep.subr.mxu0 0.0
      %1618 = vmatpush1.msra.mxu0 0.0
      %1619 = vmatprep.subr.mxu0 0.0
      %1620 = vmatpush1.msra.mxu0 0.0
      %1621 = vmatprep.subr.mxu0 0.0
      %1622 = vmatpush1.msra.mxu0 0.0
      %1623 = vmatprep.subr.mxu0 0.0
      %v1624 = vand.u32 %v1177, 4294901760
      %1625 = vmatpush1.msra.mxu0 %v1624
      %1626 = vmatprep.subr.mxu0 0.0
      %v1627 = vand.u32 %v1176, 4294901760
      %1628 = vmatpush1.msra.mxu0 %v1627
      %1629 = vmatprep.subr.mxu0 0.0
      %v1630 = vand.u32 %v1175, 4294901760
      %1631 = vmatpush1.msra.mxu0 %v1630
      %1632 = vmatprep.subr.mxu0 0.0
      %v1633 = vand.u32 %v1174, 4294901760
      %1634 = vmatpush1.msra.mxu0 %v1633
      %1635 = vmatprep.subr.mxu0 0.0
      %1636 = vmatpush2.msra.mxu0 0.0
      %1637 = vmatprep.subr.mxu0 0.0
      %1638 = vmatpush2.msra.mxu0 0.0
      %1639 = vmatprep.subr.mxu0 0.0
      %1640 = vmatpush2.msra.mxu0 0.0
      %1641 = vmatprep.subr.mxu0 0.0
      %1642 = vmatpush2.msra.mxu0 0.0
      %1643 = vmatprep.subr.mxu0 0.0
      %1644 = vmatpush2.msra.mxu0 0.0
      %1645 = vmatprep.subr.mxu0 0.0
      %1646 = vmatpush2.msra.mxu0 0.0
      %1647 = vmatprep.subr.mxu0 0.0
      %1648 = vmatpush2.msra.mxu0 0.0
      %1649 = vmatprep.subr.mxu0 0.0
      %1650 = vmatpush2.msra.mxu0 0.0
      %1651 = vmatprep.subr.mxu0 0.0
      %1652 = vmatpush2.msra.mxu0 0.0
      %1653 = vmatprep.subr.mxu0 0.0
      %1654 = vmatpush2.msra.mxu0 0.0
      %1655 = vmatprep.subr.mxu0 0.0
      %1656 = vmatpush2.msra.mxu0 0.0
      %1657 = vmatprep.subr.mxu0 0.0
      %1658 = vmatpush2.msra.mxu0 0.0
      %1659 = vmatprep.subr.mxu0 0.0
      %1660 = vmatpush2.msra.mxu0 0.0
      %1661 = vmatprep.subr.mxu0 0.0
      %1662 = vmatpush2.msra.mxu0 0.0
      %1663 = vmatprep.subr.mxu0 0.0
      %1664 = vmatpush2.msra.mxu0 0.0
      %1665 = vmatprep.subr.mxu0 0.0
      %1666 = vmatpush2.msra.mxu0 0.0
      %1667 = vmatprep.mubr.f32.mxu0 0.0
      %v1668 = vand.u32 %v1187, 4294901760
      %1669 = vmatmul.mubr.f32.gmra.mxu0 %v1668
      %v1670 = vpop.f32.mrf.mxu0
      %v1671 = vadd.f32 %v1596, %v1670
      %v1672 = vpop.f32.mrf.mxu0
      %1673 = vdwg.mxu0
      %vm1674 = vcmp.ge.f32.partialorder %v1671, 0.0
      %v1675 = vmul.f32 %v1671, 0.01
      %v1676 = vsel %vm1674, %v1671, %v1675
      %1677 = vxpose.xlu0.b32.start [1/16] %v1676, 128
      %1678 = vxpose.xlu0.b32.cont [2/16] 0.0, 128
      %1679 = vxpose.xlu0.b32.cont [3/16] 0.0, 128
      %1680 = vxpose.xlu0.b32.cont [4/16] 0.0, 128
      %1681 = vxpose.xlu0.b32.cont [5/16] 0.0, 128
      %1682 = vxpose.xlu0.b32.cont [6/16] 0.0, 128
      %1683 = vxpose.xlu0.b32.cont [7/16] 0.0, 128
      %1684 = vxpose.xlu0.b32.cont [8/16] 0.0, 128
      %1685 = vxpose.xlu0.b32.cont [9/16] 0.0, 128
      %1686 = vxpose.xlu0.b32.cont [10/16] 0.0, 128
      %1687 = vxpose.xlu0.b32.cont [11/16] 0.0, 128
      %1688 = vxpose.xlu0.b32.cont [12/16] 0.0, 128
      %1689 = vxpose.xlu0.b32.cont [13/16] 0.0, 128
      %1690 = vxpose.xlu0.b32.cont [14/16] 0.0, 128
      %1691 = vxpose.xlu0.b32.cont [15/16] 0.0, 128
      %1692 = vxpose.xlu0.b32.end [16/16] 0.0, 128
      %v1693 = vpop.trf.xlu0
      %v1694 = vpop.trf.xlu0
      %v1695 = vpop.trf.xlu0
      %v1696 = vpop.trf.xlu0
      %v1697 = vpop.trf.xlu0
      %v1698 = vpop.trf.xlu0
      %v1699 = vpop.trf.xlu0
      %v1700 = vpop.trf.xlu0
      %v1701 = vpop.trf.xlu0
      %v1702 = vpop.trf.xlu0
      %v1703 = vpop.trf.xlu0
      %v1704 = vpop.trf.xlu0
      %v1705 = vpop.trf.xlu0
      %v1706 = vpop.trf.xlu0
      %v1707 = vpop.trf.xlu0
      %v1708 = vpop.trf.xlu0
      %vm1709 = vcmask 64512
      %v1711 = vsel %vm1709, %v1693, 0
      %v1714 = vsel %vm1709, %v1694, 0
      %1716 = vmatprep.subr.mxu0 0.0
      %1717 = vmatpush1.msra.mxu0 0.0
      %1718 = vmatprep.subr.mxu0 0.0
      %1719 = vmatpush1.msra.mxu0 0.0
      %1720 = vmatprep.subr.mxu0 0.0
      %1721 = vmatpush1.msra.mxu0 0.0
      %1722 = vmatprep.subr.mxu0 0.0
      %1723 = vmatpush1.msra.mxu0 0.0
      %1724 = vmatprep.subr.mxu0 0.0
      %1725 = vmatpush1.msra.mxu0 0.0
      %1726 = vmatprep.subr.mxu0 0.0
      %1727 = vmatpush1.msra.mxu0 0.0
      %1728 = vmatprep.subr.mxu0 0.0
      %1729 = vmatpush1.msra.mxu0 0.0
      %1730 = vmatprep.subr.mxu0 0.0
      %1731 = vmatpush1.msra.mxu0 0.0
      %1732 = vmatprep.subr.mxu0 0.0
      %1733 = vmatpush1.msra.mxu0 0.0
      %1734 = vmatprep.subr.mxu0 0.0
      %1735 = vmatpush1.msra.mxu0 0.0
      %1736 = vmatprep.subr.mxu0 0.0
      %1737 = vmatpush1.msra.mxu0 0.0
      %1738 = vmatprep.subr.mxu0 0.0
      %1739 = vmatpush1.msra.mxu0 0.0
      %1740 = vmatprep.subr.mxu0 0.0
      %1741 = vmatpush1.msra.mxu0 0.0
      %1742 = vmatprep.subr.mxu0 0.0
      %1743 = vmatpush1.msra.mxu0 0.0
      %1744 = vmatprep.subr.mxu0 0.0
      %1745 = vmatpush1.msra.mxu0 0.0
      %1746 = vmatprep.subr.mxu0 0.0
      %v1747 = vand.u32 %v1676, 4294901760
      %1748 = vmatpush1.msra.mxu0 %v1747
      %1749 = vmatprep.subr.mxu0 0.0
      %1750 = vmatpush2.msra.mxu0 0.0
      %1751 = vmatprep.subr.mxu0 0.0
      %1752 = vmatpush2.msra.mxu0 0.0
      %1753 = vmatprep.subr.mxu0 0.0
      %1754 = vmatpush2.msra.mxu0 0.0
      %1755 = vmatprep.subr.mxu0 0.0
      %1756 = vmatpush2.msra.mxu0 0.0
      %1757 = vmatprep.subr.mxu0 0.0
      %1758 = vmatpush2.msra.mxu0 0.0
      %1759 = vmatprep.subr.mxu0 0.0
      %1760 = vmatpush2.msra.mxu0 0.0
      %1761 = vmatprep.subr.mxu0 0.0
      %1762 = vmatpush2.msra.mxu0 0.0
      %1763 = vmatprep.subr.mxu0 0.0
      %1764 = vmatpush2.msra.mxu0 0.0
      %1765 = vmatprep.subr.mxu0 0.0
      %1766 = vmatpush2.msra.mxu0 0.0
      %1767 = vmatprep.subr.mxu0 0.0
      %1768 = vmatpush2.msra.mxu0 0.0
      %1769 = vmatprep.subr.mxu0 0.0
      %1770 = vmatpush2.msra.mxu0 0.0
      %1771 = vmatprep.subr.mxu0 0.0
      %1772 = vmatpush2.msra.mxu0 0.0
      %1773 = vmatprep.subr.mxu0 0.0
      %1774 = vmatpush2.msra.mxu0 0.0
      %1775 = vmatprep.subr.mxu0 0.0
      %1776 = vmatpush2.msra.mxu0 0.0
      %1777 = vmatprep.subr.mxu0 0.0
      %1778 = vmatpush2.msra.mxu0 0.0
      %1779 = vmatprep.subr.mxu0 0.0
      %1780 = vmatpush2.msra.mxu0 0.0
      %1781 = vmatprep.mubr.f32.mxu0 0.0
      %v1782 = vand.u32 %v1711, 4294901760
      %v1783 = vsub.f32 %v1711, %v1782
      %v1784 = vand.u32 %v1783, 4294901760
      %v1785 = vsub.f32 %v1783, %v1784
      %v1786 = vand.u32 %v1785, 4294901760
      %1787 = vmatmul.mubr.f32.gmra.mxu0 %v1786
      %v1788 = vpop.f32.mrf.mxu0
      %v1789 = vadd.f32 0.0, %v1788
      %v1790 = vpop.f32.mrf.mxu0
      %1791 = vmatprep.mubr.f32.mxu0 0.0
      %v1792 = vand.u32 %v1714, 4294901760
      %v1793 = vsub.f32 %v1714, %v1792
      %v1794 = vand.u32 %v1793, 4294901760
      %v1795 = vsub.f32 %v1793, %v1794
      %v1796 = vand.u32 %v1795, 4294901760
      %1797 = vmatmul.mubr.f32.gmra.mxu0 %v1796
      %v1798 = vpop.f32.mrf.mxu0
      %v1799 = vadd.f32 0.0, %v1798
      %v1800 = vpop.f32.mrf.mxu0
      %1801 = vdwg.mxu0
      %1802 = vmatprep.subr.mxu0 0.0
      %1803 = vmatpush1.msra.mxu0 0.0
      %1804 = vmatprep.subr.mxu0 0.0
      %1805 = vmatpush1.msra.mxu0 0.0
      %1806 = vmatprep.subr.mxu0 0.0
      %1807 = vmatpush1.msra.mxu0 0.0
      %1808 = vmatprep.subr.mxu0 0.0
      %1809 = vmatpush1.msra.mxu0 0.0
      %1810 = vmatprep.subr.mxu0 0.0
      %1811 = vmatpush1.msra.mxu0 0.0
      %1812 = vmatprep.subr.mxu0 0.0
      %1813 = vmatpush1.msra.mxu0 0.0
      %1814 = vmatprep.subr.mxu0 0.0
      %1815 = vmatpush1.msra.mxu0 0.0
      %1816 = vmatprep.subr.mxu0 0.0
      %1817 = vmatpush1.msra.mxu0 0.0
      %1818 = vmatprep.subr.mxu0 0.0
      %1819 = vmatpush1.msra.mxu0 0.0
      %1820 = vmatprep.subr.mxu0 0.0
      %1821 = vmatpush1.msra.mxu0 0.0
      %1822 = vmatprep.subr.mxu0 0.0
      %1823 = vmatpush1.msra.mxu0 0.0
      %1824 = vmatprep.subr.mxu0 0.0
      %1825 = vmatpush1.msra.mxu0 0.0
      %1826 = vmatprep.subr.mxu0 0.0
      %1827 = vmatpush1.msra.mxu0 0.0
      %1828 = vmatprep.subr.mxu0 0.0
      %1829 = vmatpush1.msra.mxu0 0.0
      %1830 = vmatprep.subr.mxu0 0.0
      %1831 = vmatpush1.msra.mxu0 0.0
      %1832 = vmatprep.subr.mxu0 0.0
      %v1833 = vand.u32 %v1676, 4294901760
      %v1834 = vsub.f32 %v1676, %v1833
      %v1835 = vand.u32 %v1834, 4294901760
      %v1836 = vsub.f32 %v1834, %v1835
      %v1837 = vand.u32 %v1836, 4294901760
      %1838 = vmatpush1.msra.mxu0 %v1837
      %1839 = vmatprep.subr.mxu0 0.0
      %1840 = vmatpush2.msra.mxu0 0.0
      %1841 = vmatprep.subr.mxu0 0.0
      %1842 = vmatpush2.msra.mxu0 0.0
      %1843 = vmatprep.subr.mxu0 0.0
      %1844 = vmatpush2.msra.mxu0 0.0
      %1845 = vmatprep.subr.mxu0 0.0
      %1846 = vmatpush2.msra.mxu0 0.0
      %1847 = vmatprep.subr.mxu0 0.0
      %1848 = vmatpush2.msra.mxu0 0.0
      %1849 = vmatprep.subr.mxu0 0.0
      %1850 = vmatpush2.msra.mxu0 0.0
      %1851 = vmatprep.subr.mxu0 0.0
      %1852 = vmatpush2.msra.mxu0 0.0
      %1853 = vmatprep.subr.mxu0 0.0
      %1854 = vmatpush2.msra.mxu0 0.0
      %1855 = vmatprep.subr.mxu0 0.0
      %1856 = vmatpush2.msra.mxu0 0.0
      %1857 = vmatprep.subr.mxu0 0.0
      %1858 = vmatpush2.msra.mxu0 0.0
      %1859 = vmatprep.subr.mxu0 0.0
      %1860 = vmatpush2.msra.mxu0 0.0
      %1861 = vmatprep.subr.mxu0 0.0
      %1862 = vmatpush2.msra.mxu0 0.0
      %1863 = vmatprep.subr.mxu0 0.0
      %1864 = vmatpush2.msra.mxu0 0.0
      %1865 = vmatprep.subr.mxu0 0.0
      %1866 = vmatpush2.msra.mxu0 0.0
      %1867 = vmatprep.subr.mxu0 0.0
      %1868 = vmatpush2.msra.mxu0 0.0
      %1869 = vmatprep.subr.mxu0 0.0
      %1870 = vmatpush2.msra.mxu0 0.0
      %1871 = vmatprep.mubr.f32.mxu0 0.0
      %v1872 = vand.u32 %v1711, 4294901760
      %1873 = vmatmul.mubr.f32.gmra.mxu0 %v1872
      %v1874 = vpop.f32.mrf.mxu0
      %v1875 = vadd.f32 %v1789, %v1874
      %v1876 = vpop.f32.mrf.mxu0
      %1877 = vmatprep.mubr.f32.mxu0 0.0
      %v1878 = vand.u32 %v1714, 4294901760
      %1879 = vmatmul.mubr.f32.gmra.mxu0 %v1878
      %v1880 = vpop.f32.mrf.mxu0
      %v1881 = vadd.f32 %v1799, %v1880
      %v1882 = vpop.f32.mrf.mxu0
      %1883 = vdwg.mxu0
      %1884 = vmatprep.subr.mxu0 0.0
      %1885 = vmatpush1.msra.mxu0 0.0
      %1886 = vmatprep.subr.mxu0 0.0
      %1887 = vmatpush1.msra.mxu0 0.0
      %1888 = vmatprep.subr.mxu0 0.0
      %1889 = vmatpush1.msra.mxu0 0.0
      %1890 = vmatprep.subr.mxu0 0.0
      %1891 = vmatpush1.msra.mxu0 0.0
      %1892 = vmatprep.subr.mxu0 0.0
      %1893 = vmatpush1.msra.mxu0 0.0
      %1894 = vmatprep.subr.mxu0 0.0
      %1895 = vmatpush1.msra.mxu0 0.0
      %1896 = vmatprep.subr.mxu0 0.0
      %1897 = vmatpush1.msra.mxu0 0.0
      %1898 = vmatprep.subr.mxu0 0.0
      %1899 = vmatpush1.msra.mxu0 0.0
      %1900 = vmatprep.subr.mxu0 0.0
      %1901 = vmatpush1.msra.mxu0 0.0
      %1902 = vmatprep.subr.mxu0 0.0
      %1903 = vmatpush1.msra.mxu0 0.0
      %1904 = vmatprep.subr.mxu0 0.0
      %1905 = vmatpush1.msra.mxu0 0.0
      %1906 = vmatprep.subr.mxu0 0.0
      %1907 = vmatpush1.msra.mxu0 0.0
      %1908 = vmatprep.subr.mxu0 0.0
      %1909 = vmatpush1.msra.mxu0 0.0
      %1910 = vmatprep.subr.mxu0 0.0
      %1911 = vmatpush1.msra.mxu0 0.0
      %1912 = vmatprep.subr.mxu0 0.0
      %1913 = vmatpush1.msra.mxu0 0.0
      %1914 = vmatprep.subr.mxu0 0.0
      %v1915 = vand.u32 %v1676, 4294901760
      %v1916 = vsub.f32 %v1676, %v1915
      %1917 = vmatpush1.msra.mxu0 %v1916
      %1918 = vmatprep.subr.mxu0 0.0
      %1919 = vmatpush2.msra.mxu0 0.0
      %1920 = vmatprep.subr.mxu0 0.0
      %1921 = vmatpush2.msra.mxu0 0.0
      %1922 = vmatprep.subr.mxu0 0.0
      %1923 = vmatpush2.msra.mxu0 0.0
      %1924 = vmatprep.subr.mxu0 0.0
      %1925 = vmatpush2.msra.mxu0 0.0
      %1926 = vmatprep.subr.mxu0 0.0
      %1927 = vmatpush2.msra.mxu0 0.0
      %1928 = vmatprep.subr.mxu0 0.0
      %1929 = vmatpush2.msra.mxu0 0.0
      %1930 = vmatprep.subr.mxu0 0.0
      %1931 = vmatpush2.msra.mxu0 0.0
      %1932 = vmatprep.subr.mxu0 0.0
      %1933 = vmatpush2.msra.mxu0 0.0
      %1934 = vmatprep.subr.mxu0 0.0
      %1935 = vmatpush2.msra.mxu0 0.0
      %1936 = vmatprep.subr.mxu0 0.0
      %1937 = vmatpush2.msra.mxu0 0.0
      %1938 = vmatprep.subr.mxu0 0.0
      %1939 = vmatpush2.msra.mxu0 0.0
      %1940 = vmatprep.subr.mxu0 0.0
      %1941 = vmatpush2.msra.mxu0 0.0
      %1942 = vmatprep.subr.mxu0 0.0
      %1943 = vmatpush2.msra.mxu0 0.0
      %1944 = vmatprep.subr.mxu0 0.0
      %1945 = vmatpush2.msra.mxu0 0.0
      %1946 = vmatprep.subr.mxu0 0.0
      %1947 = vmatpush2.msra.mxu0 0.0
      %1948 = vmatprep.subr.mxu0 0.0
      %1949 = vmatpush2.msra.mxu0 0.0
      %1950 = vmatprep.mubr.f32.mxu0 0.0
      %v1951 = vand.u32 %v1711, 4294901760
      %v1952 = vsub.f32 %v1711, %v1951
      %1953 = vmatmul.mubr.f32.gmra.mxu0 %v1952
      %v1954 = vpop.f32.mrf.mxu0
      %v1955 = vadd.f32 %v1875, %v1954
      %v1956 = vpop.f32.mrf.mxu0
      %1957 = vmatprep.mubr.f32.mxu0 0.0
      %v1958 = vand.u32 %v1714, 4294901760
      %v1959 = vsub.f32 %v1714, %v1958
      %1960 = vmatmul.mubr.f32.gmra.mxu0 %v1959
      %v1961 = vpop.f32.mrf.mxu0
      %v1962 = vadd.f32 %v1881, %v1961
      %v1963 = vpop.f32.mrf.mxu0
      %1964 = vdwg.mxu0
      %1965 = vmatprep.subr.mxu0 0.0
      %1966 = vmatpush1.msra.mxu0 0.0
      %1967 = vmatprep.subr.mxu0 0.0
      %1968 = vmatpush1.msra.mxu0 0.0
      %1969 = vmatprep.subr.mxu0 0.0
      %1970 = vmatpush1.msra.mxu0 0.0
      %1971 = vmatprep.subr.mxu0 0.0
      %1972 = vmatpush1.msra.mxu0 0.0
      %1973 = vmatprep.subr.mxu0 0.0
      %1974 = vmatpush1.msra.mxu0 0.0
      %1975 = vmatprep.subr.mxu0 0.0
      %1976 = vmatpush1.msra.mxu0 0.0
      %1977 = vmatprep.subr.mxu0 0.0
      %1978 = vmatpush1.msra.mxu0 0.0
      %1979 = vmatprep.subr.mxu0 0.0
      %1980 = vmatpush1.msra.mxu0 0.0
      %1981 = vmatprep.subr.mxu0 0.0
      %1982 = vmatpush1.msra.mxu0 0.0
      %1983 = vmatprep.subr.mxu0 0.0
      %1984 = vmatpush1.msra.mxu0 0.0
      %1985 = vmatprep.subr.mxu0 0.0
      %1986 = vmatpush1.msra.mxu0 0.0
      %1987 = vmatprep.subr.mxu0 0.0
      %1988 = vmatpush1.msra.mxu0 0.0
      %1989 = vmatprep.subr.mxu0 0.0
      %1990 = vmatpush1.msra.mxu0 0.0
      %1991 = vmatprep.subr.mxu0 0.0
      %1992 = vmatpush1.msra.mxu0 0.0
      %1993 = vmatprep.subr.mxu0 0.0
      %1994 = vmatpush1.msra.mxu0 0.0
      %1995 = vmatprep.subr.mxu0 0.0
      %v1996 = vand.u32 %v1676, 4294901760
      %1997 = vmatpush1.msra.mxu0 %v1996
      %1998 = vmatprep.subr.mxu0 0.0
      %1999 = vmatpush2.msra.mxu0 0.0
      %2000 = vmatprep.subr.mxu0 0.0
      %2001 = vmatpush2.msra.mxu0 0.0
      %2002 = vmatprep.subr.mxu0 0.0
      %2003 = vmatpush2.msra.mxu0 0.0
      %2004 = vmatprep.subr.mxu0 0.0
      %2005 = vmatpush2.msra.mxu0 0.0
      %2006 = vmatprep.subr.mxu0 0.0
      %2007 = vmatpush2.msra.mxu0 0.0
      %2008 = vmatprep.subr.mxu0 0.0
      %2009 = vmatpush2.msra.mxu0 0.0
      %2010 = vmatprep.subr.mxu0 0.0
      %2011 = vmatpush2.msra.mxu0 0.0
      %2012 = vmatprep.subr.mxu0 0.0
      %2013 = vmatpush2.msra.mxu0 0.0
      %2014 = vmatprep.subr.mxu0 0.0
      %2015 = vmatpush2.msra.mxu0 0.0
      %2016 = vmatprep.subr.mxu0 0.0
      %2017 = vmatpush2.msra.mxu0 0.0
      %2018 = vmatprep.subr.mxu0 0.0
      %2019 = vmatpush2.msra.mxu0 0.0
      %2020 = vmatprep.subr.mxu0 0.0
      %2021 = vmatpush2.msra.mxu0 0.0
      %2022 = vmatprep.subr.mxu0 0.0
      %2023 = vmatpush2.msra.mxu0 0.0
      %2024 = vmatprep.subr.mxu0 0.0
      %2025 = vmatpush2.msra.mxu0 0.0
      %2026 = vmatprep.subr.mxu0 0.0
      %2027 = vmatpush2.msra.mxu0 0.0
      %2028 = vmatprep.subr.mxu0 0.0
      %2029 = vmatpush2.msra.mxu0 0.0
      %2030 = vmatprep.mubr.f32.mxu0 0.0
      %v2031 = vand.u32 %v1711, 4294901760
      %v2032 = vsub.f32 %v1711, %v2031
      %v2033 = vand.u32 %v2032, 4294901760
      %2034 = vmatmul.mubr.f32.gmra.mxu0 %v2033
      %v2035 = vpop.f32.mrf.mxu0
      %v2036 = vadd.f32 %v1955, %v2035
      %v2037 = vpop.f32.mrf.mxu0
      %2038 = vmatprep.mubr.f32.mxu0 0.0
      %v2039 = vand.u32 %v1714, 4294901760
      %v2040 = vsub.f32 %v1714, %v2039
      %v2041 = vand.u32 %v2040, 4294901760
      %2042 = vmatmul.mubr.f32.gmra.mxu0 %v2041
      %v2043 = vpop.f32.mrf.mxu0
      %v2044 = vadd.f32 %v1962, %v2043
      %v2045 = vpop.f32.mrf.mxu0
      %2046 = vdwg.mxu0
      %2047 = vmatprep.subr.mxu0 0.0
      %2048 = vmatpush1.msra.mxu0 0.0
      %2049 = vmatprep.subr.mxu0 0.0
      %2050 = vmatpush1.msra.mxu0 0.0
      %2051 = vmatprep.subr.mxu0 0.0
      %2052 = vmatpush1.msra.mxu0 0.0
      %2053 = vmatprep.subr.mxu0 0.0
      %2054 = vmatpush1.msra.mxu0 0.0
      %2055 = vmatprep.subr.mxu0 0.0
      %2056 = vmatpush1.msra.mxu0 0.0
      %2057 = vmatprep.subr.mxu0 0.0
      %2058 = vmatpush1.msra.mxu0 0.0
      %2059 = vmatprep.subr.mxu0 0.0
      %2060 = vmatpush1.msra.mxu0 0.0
      %2061 = vmatprep.subr.mxu0 0.0
      %2062 = vmatpush1.msra.mxu0 0.0
      %2063 = vmatprep.subr.mxu0 0.0
      %2064 = vmatpush1.msra.mxu0 0.0
      %2065 = vmatprep.subr.mxu0 0.0
      %2066 = vmatpush1.msra.mxu0 0.0
      %2067 = vmatprep.subr.mxu0 0.0
      %2068 = vmatpush1.msra.mxu0 0.0
      %2069 = vmatprep.subr.mxu0 0.0
      %2070 = vmatpush1.msra.mxu0 0.0
      %2071 = vmatprep.subr.mxu0 0.0
      %2072 = vmatpush1.msra.mxu0 0.0
      %2073 = vmatprep.subr.mxu0 0.0
      %2074 = vmatpush1.msra.mxu0 0.0
      %2075 = vmatprep.subr.mxu0 0.0
      %2076 = vmatpush1.msra.mxu0 0.0
      %2077 = vmatprep.subr.mxu0 0.0
      %v2078 = vand.u32 %v1676, 4294901760
      %v2079 = vsub.f32 %v1676, %v2078
      %v2080 = vand.u32 %v2079, 4294901760
      %2081 = vmatpush1.msra.mxu0 %v2080
      %2082 = vmatprep.subr.mxu0 0.0
      %2083 = vmatpush2.msra.mxu0 0.0
      %2084 = vmatprep.subr.mxu0 0.0
      %2085 = vmatpush2.msra.mxu0 0.0
      %2086 = vmatprep.subr.mxu0 0.0
      %2087 = vmatpush2.msra.mxu0 0.0
      %2088 = vmatprep.subr.mxu0 0.0
      %2089 = vmatpush2.msra.mxu0 0.0
      %2090 = vmatprep.subr.mxu0 0.0
      %2091 = vmatpush2.msra.mxu0 0.0
      %2092 = vmatprep.subr.mxu0 0.0
      %2093 = vmatpush2.msra.mxu0 0.0
      %2094 = vmatprep.subr.mxu0 0.0
      %2095 = vmatpush2.msra.mxu0 0.0
      %2096 = vmatprep.subr.mxu0 0.0
      %2097 = vmatpush2.msra.mxu0 0.0
      %2098 = vmatprep.subr.mxu0 0.0
      %2099 = vmatpush2.msra.mxu0 0.0
      %2100 = vmatprep.subr.mxu0 0.0
      %2101 = vmatpush2.msra.mxu0 0.0
      %2102 = vmatprep.subr.mxu0 0.0
      %2103 = vmatpush2.msra.mxu0 0.0
      %2104 = vmatprep.subr.mxu0 0.0
      %2105 = vmatpush2.msra.mxu0 0.0
      %2106 = vmatprep.subr.mxu0 0.0
      %2107 = vmatpush2.msra.mxu0 0.0
      %2108 = vmatprep.subr.mxu0 0.0
      %2109 = vmatpush2.msra.mxu0 0.0
      %2110 = vmatprep.subr.mxu0 0.0
      %2111 = vmatpush2.msra.mxu0 0.0
      %2112 = vmatprep.subr.mxu0 0.0
      %2113 = vmatpush2.msra.mxu0 0.0
      %2114 = vmatprep.mubr.f32.mxu0 0.0
      %v2115 = vand.u32 %v1711, 4294901760
      %2116 = vmatmul.mubr.f32.gmra.mxu0 %v2115
      %v2117 = vpop.f32.mrf.mxu0
      %v2118 = vadd.f32 %v2036, %v2117
      %v2119 = vpop.f32.mrf.mxu0
      %2120 = vmatprep.mubr.f32.mxu0 0.0
      %v2121 = vand.u32 %v1714, 4294901760
      %2122 = vmatmul.mubr.f32.gmra.mxu0 %v2121
      %v2123 = vpop.f32.mrf.mxu0
      %v2124 = vadd.f32 %v2044, %v2123
      %v2125 = vpop.f32.mrf.mxu0
      %2126 = vdwg.mxu0
      %2127 = vmatprep.subr.mxu0 0.0
      %2128 = vmatpush1.msra.mxu0 0.0
      %2129 = vmatprep.subr.mxu0 0.0
      %2130 = vmatpush1.msra.mxu0 0.0
      %2131 = vmatprep.subr.mxu0 0.0
      %2132 = vmatpush1.msra.mxu0 0.0
      %2133 = vmatprep.subr.mxu0 0.0
      %2134 = vmatpush1.msra.mxu0 0.0
      %2135 = vmatprep.subr.mxu0 0.0
      %2136 = vmatpush1.msra.mxu0 0.0
      %2137 = vmatprep.subr.mxu0 0.0
      %2138 = vmatpush1.msra.mxu0 0.0
      %2139 = vmatprep.subr.mxu0 0.0
      %2140 = vmatpush1.msra.mxu0 0.0
      %2141 = vmatprep.subr.mxu0 0.0
      %2142 = vmatpush1.msra.mxu0 0.0
      %2143 = vmatprep.subr.mxu0 0.0
      %2144 = vmatpush1.msra.mxu0 0.0
      %2145 = vmatprep.subr.mxu0 0.0
      %2146 = vmatpush1.msra.mxu0 0.0
      %2147 = vmatprep.subr.mxu0 0.0
      %2148 = vmatpush1.msra.mxu0 0.0
      %2149 = vmatprep.subr.mxu0 0.0
      %2150 = vmatpush1.msra.mxu0 0.0
      %2151 = vmatprep.subr.mxu0 0.0
      %2152 = vmatpush1.msra.mxu0 0.0
      %2153 = vmatprep.subr.mxu0 0.0
      %2154 = vmatpush1.msra.mxu0 0.0
      %2155 = vmatprep.subr.mxu0 0.0
      %2156 = vmatpush1.msra.mxu0 0.0
      %2157 = vmatprep.subr.mxu0 0.0
      %v2158 = vand.u32 %v1676, 4294901760
      %2159 = vmatpush1.msra.mxu0 %v2158
      %2160 = vmatprep.subr.mxu0 0.0
      %2161 = vmatpush2.msra.mxu0 0.0
      %2162 = vmatprep.subr.mxu0 0.0
      %2163 = vmatpush2.msra.mxu0 0.0
      %2164 = vmatprep.subr.mxu0 0.0
      %2165 = vmatpush2.msra.mxu0 0.0
      %2166 = vmatprep.subr.mxu0 0.0
      %2167 = vmatpush2.msra.mxu0 0.0
      %2168 = vmatprep.subr.mxu0 0.0
      %2169 = vmatpush2.msra.mxu0 0.0
      %2170 = vmatprep.subr.mxu0 0.0
      %2171 = vmatpush2.msra.mxu0 0.0
      %2172 = vmatprep.subr.mxu0 0.0
      %2173 = vmatpush2.msra.mxu0 0.0
      %2174 = vmatprep.subr.mxu0 0.0
      %2175 = vmatpush2.msra.mxu0 0.0
      %2176 = vmatprep.subr.mxu0 0.0
      %2177 = vmatpush2.msra.mxu0 0.0
      %2178 = vmatprep.subr.mxu0 0.0
      %2179 = vmatpush2.msra.mxu0 0.0
      %2180 = vmatprep.subr.mxu0 0.0
      %2181 = vmatpush2.msra.mxu0 0.0
      %2182 = vmatprep.subr.mxu0 0.0
      %2183 = vmatpush2.msra.mxu0 0.0
      %2184 = vmatprep.subr.mxu0 0.0
      %2185 = vmatpush2.msra.mxu0 0.0
      %2186 = vmatprep.subr.mxu0 0.0
      %2187 = vmatpush2.msra.mxu0 0.0
      %2188 = vmatprep.subr.mxu0 0.0
      %2189 = vmatpush2.msra.mxu0 0.0
      %2190 = vmatprep.subr.mxu0 0.0
      %2191 = vmatpush2.msra.mxu0 0.0
      %2192 = vmatprep.mubr.f32.mxu0 0.0
      %v2193 = vand.u32 %v1711, 4294901760
      %2194 = vmatmul.mubr.f32.gmra.mxu0 %v2193
      %v2195 = vpop.f32.mrf.mxu0
      %v2196 = vadd.f32 %v2118, %v2195
      %v2197 = vpop.f32.mrf.mxu0
      %2198 = vmatprep.mubr.f32.mxu0 0.0
      %v2199 = vand.u32 %v1714, 4294901760
      %2200 = vmatmul.mubr.f32.gmra.mxu0 %v2199
      %v2201 = vpop.f32.mrf.mxu0
      %v2202 = vadd.f32 %v2124, %v2201
      %v2203 = vpop.f32.mrf.mxu0
      %2204 = vdwg.mxu0
      %vm2205 = vcmask 97280
      %v2207 = vsel %vm2205, %v2196, 0
      %v2210 = vsel %vm2205, %v2202, 0
      %v2213 = vsel %vm316, %v1171, 0
      %v2216 = vsel %vm316, %v1172, 0
      %2218 = vmatprep.subr.mxu0 0.0
      %2219 = vmatpush1.msra.mxu0 0.0
      %2220 = vmatprep.subr.mxu0 0.0
      %2221 = vmatpush1.msra.mxu0 0.0
      %2222 = vmatprep.subr.mxu0 0.0
      %2223 = vmatpush1.msra.mxu0 0.0
      %2224 = vmatprep.subr.mxu0 0.0
      %2225 = vmatpush1.msra.mxu0 0.0
      %2226 = vmatprep.subr.mxu0 0.0
      %2227 = vmatpush1.msra.mxu0 0.0
      %2228 = vmatprep.subr.mxu0 0.0
      %2229 = vmatpush1.msra.mxu0 0.0
      %2230 = vmatprep.subr.mxu0 0.0
      %2231 = vmatpush1.msra.mxu0 0.0
      %2232 = vmatprep.subr.mxu0 0.0
      %2233 = vmatpush1.msra.mxu0 0.0
      %2234 = vmatprep.subr.mxu0 0.0
      %2235 = vmatpush1.msra.mxu0 0.0
      %2236 = vmatprep.subr.mxu0 0.0
      %2237 = vmatpush1.msra.mxu0 0.0
      %2238 = vmatprep.subr.mxu0 0.0
      %2239 = vmatpush1.msra.mxu0 0.0
      %2240 = vmatprep.subr.mxu0 0.0
      %2241 = vmatpush1.msra.mxu0 0.0
      %2242 = vmatprep.subr.mxu0 0.0
      %2243 = vmatpush1.msra.mxu0 0.0
      %2244 = vmatprep.subr.mxu0 0.0
      %2245 = vmatpush1.msra.mxu0 0.0
      %v2246 = vand.u32 %v2216, 4294901760
      %2247 = vmatprep.subr.mxu0 %v2246
      %v2248 = vand.u32 %v2213, 4294901760
      %2249 = vmatpush1.msra.mxu0 %v2248
      %v2250 = vand.u32 %v1170, 4294901760
      %2251 = vmatprep.subr.mxu0 %v2250
      %v2252 = vand.u32 %v1169, 4294901760
      %2253 = vmatpush1.msra.mxu0 %v2252
      %2254 = vmatprep.subr.mxu0 0.0
      %2255 = vmatpush2.msra.mxu0 0.0
      %2256 = vmatprep.subr.mxu0 0.0
      %2257 = vmatpush2.msra.mxu0 0.0
      %2258 = vmatprep.subr.mxu0 0.0
      %2259 = vmatpush2.msra.mxu0 0.0
      %2260 = vmatprep.subr.mxu0 0.0
      %2261 = vmatpush2.msra.mxu0 0.0
      %2262 = vmatprep.subr.mxu0 0.0
      %2263 = vmatpush2.msra.mxu0 0.0
      %2264 = vmatprep.subr.mxu0 0.0
      %2265 = vmatpush2.msra.mxu0 0.0
      %2266 = vmatprep.subr.mxu0 0.0
      %2267 = vmatpush2.msra.mxu0 0.0
      %2268 = vmatprep.subr.mxu0 0.0
      %2269 = vmatpush2.msra.mxu0 0.0
      %2270 = vmatprep.subr.mxu0 0.0
      %2271 = vmatpush2.msra.mxu0 0.0
      %2272 = vmatprep.subr.mxu0 0.0
      %2273 = vmatpush2.msra.mxu0 0.0
      %2274 = vmatprep.subr.mxu0 0.0
      %2275 = vmatpush2.msra.mxu0 0.0
      %2276 = vmatprep.subr.mxu0 0.0
      %2277 = vmatpush2.msra.mxu0 0.0
      %2278 = vmatprep.subr.mxu0 0.0
      %2279 = vmatpush2.msra.mxu0 0.0
      %2280 = vmatprep.subr.mxu0 0.0
      %2281 = vmatpush2.msra.mxu0 0.0
      %2282 = vmatprep.subr.mxu0 0.0
      %2283 = vmatpush2.msra.mxu0 0.0
      %2284 = vmatprep.subr.mxu0 0.0
      %2285 = vmatpush2.msra.mxu0 0.0
      %2286 = vmatprep.mubr.f32.mxu0 0.0
      %v2287 = vand.u32 %v2207, 4294901760
      %v2288 = vsub.f32 %v2207, %v2287
      %v2289 = vand.u32 %v2288, 4294901760
      %v2290 = vsub.f32 %v2288, %v2289
      %v2291 = vand.u32 %v2290, 4294901760
      %2292 = vmatmul.mubr.f32.gmra.mxu0 %v2291
      %v2293 = vpop.f32.mrf.mxu0
      %v2294 = vadd.f32 0.0, %v2293
      %v2295 = vpop.f32.mrf.mxu0
      %v2296 = vadd.f32 0.0, %v2295
      %2297 = vmatprep.mubr.f32.mxu0 0.0
      %v2298 = vand.u32 %v2210, 4294901760
      %v2299 = vsub.f32 %v2210, %v2298
      %v2300 = vand.u32 %v2299, 4294901760
      %v2301 = vsub.f32 %v2299, %v2300
      %v2302 = vand.u32 %v2301, 4294901760
      %2303 = vmatmul.mubr.f32.gmra.mxu0 %v2302
      %v2304 = vpop.f32.mrf.mxu0
      %v2305 = vadd.f32 0.0, %v2304
      %v2306 = vpop.f32.mrf.mxu0
      %v2307 = vadd.f32 0.0, %v2306
      %2308 = vdwg.mxu0
      %2309 = vmatprep.subr.mxu0 0.0
      %2310 = vmatpush1.msra.mxu0 0.0
      %2311 = vmatprep.subr.mxu0 0.0
      %2312 = vmatpush1.msra.mxu0 0.0
      %2313 = vmatprep.subr.mxu0 0.0
      %2314 = vmatpush1.msra.mxu0 0.0
      %2315 = vmatprep.subr.mxu0 0.0
      %2316 = vmatpush1.msra.mxu0 0.0
      %2317 = vmatprep.subr.mxu0 0.0
      %2318 = vmatpush1.msra.mxu0 0.0
      %2319 = vmatprep.subr.mxu0 0.0
      %2320 = vmatpush1.msra.mxu0 0.0
      %2321 = vmatprep.subr.mxu0 0.0
      %2322 = vmatpush1.msra.mxu0 0.0
      %2323 = vmatprep.subr.mxu0 0.0
      %2324 = vmatpush1.msra.mxu0 0.0
      %2325 = vmatprep.subr.mxu0 0.0
      %2326 = vmatpush1.msra.mxu0 0.0
      %2327 = vmatprep.subr.mxu0 0.0
      %2328 = vmatpush1.msra.mxu0 0.0
      %2329 = vmatprep.subr.mxu0 0.0
      %2330 = vmatpush1.msra.mxu0 0.0
      %2331 = vmatprep.subr.mxu0 0.0
      %2332 = vmatpush1.msra.mxu0 0.0
      %2333 = vmatprep.subr.mxu0 0.0
      %2334 = vmatpush1.msra.mxu0 0.0
      %2335 = vmatprep.subr.mxu0 0.0
      %2336 = vmatpush1.msra.mxu0 0.0
      %v2337 = vand.u32 %v2216, 4294901760
      %v2338 = vsub.f32 %v2216, %v2337
      %v2339 = vand.u32 %v2338, 4294901760
      %v2340 = vsub.f32 %v2338, %v2339
      %v2341 = vand.u32 %v2340, 4294901760
      %2342 = vmatprep.subr.mxu0 %v2341
      %v2343 = vand.u32 %v2213, 4294901760
      %v2344 = vsub.f32 %v2213, %v2343
      %v2345 = vand.u32 %v2344, 4294901760
      %v2346 = vsub.f32 %v2344, %v2345
      %v2347 = vand.u32 %v2346, 4294901760
      %2348 = vmatpush1.msra.mxu0 %v2347
      %v2349 = vand.u32 %v1170, 4294901760
      %v2350 = vsub.f32 %v1170, %v2349
      %v2351 = vand.u32 %v2350, 4294901760
      %v2352 = vsub.f32 %v2350, %v2351
      %v2353 = vand.u32 %v2352, 4294901760
      %2354 = vmatprep.subr.mxu0 %v2353
      %v2355 = vand.u32 %v1169, 4294901760
      %v2356 = vsub.f32 %v1169, %v2355
      %v2357 = vand.u32 %v2356, 4294901760
      %v2358 = vsub.f32 %v2356, %v2357
      %v2359 = vand.u32 %v2358, 4294901760
      %2360 = vmatpush1.msra.mxu0 %v2359
      %2361 = vmatprep.subr.mxu0 0.0
      %2362 = vmatpush2.msra.mxu0 0.0
      %2363 = vmatprep.subr.mxu0 0.0
      %2364 = vmatpush2.msra.mxu0 0.0
      %2365 = vmatprep.subr.mxu0 0.0
      %2366 = vmatpush2.msra.mxu0 0.0
      %2367 = vmatprep.subr.mxu0 0.0
      %2368 = vmatpush2.msra.mxu0 0.0
      %2369 = vmatprep.subr.mxu0 0.0
      %2370 = vmatpush2.msra.mxu0 0.0
      %2371 = vmatprep.subr.mxu0 0.0
      %2372 = vmatpush2.msra.mxu0 0.0
      %2373 = vmatprep.subr.mxu0 0.0
      %2374 = vmatpush2.msra.mxu0 0.0
      %2375 = vmatprep.subr.mxu0 0.0
      %2376 = vmatpush2.msra.mxu0 0.0
      %2377 = vmatprep.subr.mxu0 0.0
      %2378 = vmatpush2.msra.mxu0 0.0
      %2379 = vmatprep.subr.mxu0 0.0
      %2380 = vmatpush2.msra.mxu0 0.0
      %2381 = vmatprep.subr.mxu0 0.0
      %2382 = vmatpush2.msra.mxu0 0.0
      %2383 = vmatprep.subr.mxu0 0.0
      %2384 = vmatpush2.msra.mxu0 0.0
      %2385 = vmatprep.subr.mxu0 0.0
      %2386 = vmatpush2.msra.mxu0 0.0
      %2387 = vmatprep.subr.mxu0 0.0
      %2388 = vmatpush2.msra.mxu0 0.0
      %2389 = vmatprep.subr.mxu0 0.0
      %2390 = vmatpush2.msra.mxu0 0.0
      %2391 = vmatprep.subr.mxu0 0.0
      %2392 = vmatpush2.msra.mxu0 0.0
      %2393 = vmatprep.mubr.f32.mxu0 0.0
      %v2394 = vand.u32 %v2207, 4294901760
      %2395 = vmatmul.mubr.f32.gmra.mxu0 %v2394
      %v2396 = vpop.f32.mrf.mxu0
      %v2397 = vadd.f32 %v2294, %v2396
      %v2398 = vpop.f32.mrf.mxu0
      %v2399 = vadd.f32 %v2296, %v2398
      %2400 = vmatprep.mubr.f32.mxu0 0.0
      %v2401 = vand.u32 %v2210, 4294901760
      %2402 = vmatmul.mubr.f32.gmra.mxu0 %v2401
      %v2403 = vpop.f32.mrf.mxu0
      %v2404 = vadd.f32 %v2305, %v2403
      %v2405 = vpop.f32.mrf.mxu0
      %v2406 = vadd.f32 %v2307, %v2405
      %2407 = vdwg.mxu0
      %2408 = vmatprep.subr.mxu0 0.0
      %2409 = vmatpush1.msra.mxu0 0.0
      %2410 = vmatprep.subr.mxu0 0.0
      %2411 = vmatpush1.msra.mxu0 0.0
      %2412 = vmatprep.subr.mxu0 0.0
      %2413 = vmatpush1.msra.mxu0 0.0
      %2414 = vmatprep.subr.mxu0 0.0
      %2415 = vmatpush1.msra.mxu0 0.0
      %2416 = vmatprep.subr.mxu0 0.0
      %2417 = vmatpush1.msra.mxu0 0.0
      %2418 = vmatprep.subr.mxu0 0.0
      %2419 = vmatpush1.msra.mxu0 0.0
      %2420 = vmatprep.subr.mxu0 0.0
      %2421 = vmatpush1.msra.mxu0 0.0
      %2422 = vmatprep.subr.mxu0 0.0
      %2423 = vmatpush1.msra.mxu0 0.0
      %2424 = vmatprep.subr.mxu0 0.0
      %2425 = vmatpush1.msra.mxu0 0.0
      %2426 = vmatprep.subr.mxu0 0.0
      %2427 = vmatpush1.msra.mxu0 0.0
      %2428 = vmatprep.subr.mxu0 0.0
      %2429 = vmatpush1.msra.mxu0 0.0
      %2430 = vmatprep.subr.mxu0 0.0
      %2431 = vmatpush1.msra.mxu0 0.0
      %2432 = vmatprep.subr.mxu0 0.0
      %2433 = vmatpush1.msra.mxu0 0.0
      %2434 = vmatprep.subr.mxu0 0.0
      %2435 = vmatpush1.msra.mxu0 0.0
      %v2436 = vand.u32 %v2216, 4294901760
      %v2437 = vsub.f32 %v2216, %v2436
      %2438 = vmatprep.subr.mxu0 %v2437
      %v2439 = vand.u32 %v2213, 4294901760
      %v2440 = vsub.f32 %v2213, %v2439
      %2441 = vmatpush1.msra.mxu0 %v2440
      %v2442 = vand.u32 %v1170, 4294901760
      %v2443 = vsub.f32 %v1170, %v2442
      %2444 = vmatprep.subr.mxu0 %v2443
      %v2445 = vand.u32 %v1169, 4294901760
      %v2446 = vsub.f32 %v1169, %v2445
      %2447 = vmatpush1.msra.mxu0 %v2446
      %2448 = vmatprep.subr.mxu0 0.0
      %2449 = vmatpush2.msra.mxu0 0.0
      %2450 = vmatprep.subr.mxu0 0.0
      %2451 = vmatpush2.msra.mxu0 0.0
      %2452 = vmatprep.subr.mxu0 0.0
      %2453 = vmatpush2.msra.mxu0 0.0
      %2454 = vmatprep.subr.mxu0 0.0
      %2455 = vmatpush2.msra.mxu0 0.0
      %2456 = vmatprep.subr.mxu0 0.0
      %2457 = vmatpush2.msra.mxu0 0.0
      %2458 = vmatprep.subr.mxu0 0.0
      %2459 = vmatpush2.msra.mxu0 0.0
      %2460 = vmatprep.subr.mxu0 0.0
      %2461 = vmatpush2.msra.mxu0 0.0
      %2462 = vmatprep.subr.mxu0 0.0
      %2463 = vmatpush2.msra.mxu0 0.0
      %2464 = vmatprep.subr.mxu0 0.0
      %2465 = vmatpush2.msra.mxu0 0.0
      %2466 = vmatprep.subr.mxu0 0.0
      %2467 = vmatpush2.msra.mxu0 0.0
      %2468 = vmatprep.subr.mxu0 0.0
      %2469 = vmatpush2.msra.mxu0 0.0
      %2470 = vmatprep.subr.mxu0 0.0
      %2471 = vmatpush2.msra.mxu0 0.0
      %2472 = vmatprep.subr.mxu0 0.0
      %2473 = vmatpush2.msra.mxu0 0.0
      %2474 = vmatprep.subr.mxu0 0.0
      %2475 = vmatpush2.msra.mxu0 0.0
      %2476 = vmatprep.subr.mxu0 0.0
      %2477 = vmatpush2.msra.mxu0 0.0
      %2478 = vmatprep.subr.mxu0 0.0
      %2479 = vmatpush2.msra.mxu0 0.0
      %2480 = vmatprep.mubr.f32.mxu0 0.0
      %v2481 = vand.u32 %v2207, 4294901760
      %v2482 = vsub.f32 %v2207, %v2481
      %2483 = vmatmul.mubr.f32.gmra.mxu0 %v2482
      %v2484 = vpop.f32.mrf.mxu0
      %v2485 = vadd.f32 %v2397, %v2484
      %v2486 = vpop.f32.mrf.mxu0
      %v2487 = vadd.f32 %v2399, %v2486
      %2488 = vmatprep.mubr.f32.mxu0 0.0
      %v2489 = vand.u32 %v2210, 4294901760
      %v2490 = vsub.f32 %v2210, %v2489
      %2491 = vmatmul.mubr.f32.gmra.mxu0 %v2490
      %v2492 = vpop.f32.mrf.mxu0
      %v2493 = vadd.f32 %v2404, %v2492
      %v2494 = vpop.f32.mrf.mxu0
      %v2495 = vadd.f32 %v2406, %v2494
      %2496 = vdwg.mxu0
      %2497 = vmatprep.subr.mxu0 0.0
      %2498 = vmatpush1.msra.mxu0 0.0
      %2499 = vmatprep.subr.mxu0 0.0
      %2500 = vmatpush1.msra.mxu0 0.0
      %2501 = vmatprep.subr.mxu0 0.0
      %2502 = vmatpush1.msra.mxu0 0.0
      %2503 = vmatprep.subr.mxu0 0.0
      %2504 = vmatpush1.msra.mxu0 0.0
      %2505 = vmatprep.subr.mxu0 0.0
      %2506 = vmatpush1.msra.mxu0 0.0
      %2507 = vmatprep.subr.mxu0 0.0
      %2508 = vmatpush1.msra.mxu0 0.0
      %2509 = vmatprep.subr.mxu0 0.0
      %2510 = vmatpush1.msra.mxu0 0.0
      %2511 = vmatprep.subr.mxu0 0.0
      %2512 = vmatpush1.msra.mxu0 0.0
      %2513 = vmatprep.subr.mxu0 0.0
      %2514 = vmatpush1.msra.mxu0 0.0
      %2515 = vmatprep.subr.mxu0 0.0
      %2516 = vmatpush1.msra.mxu0 0.0
      %2517 = vmatprep.subr.mxu0 0.0
      %2518 = vmatpush1.msra.mxu0 0.0
      %2519 = vmatprep.subr.mxu0 0.0
      %2520 = vmatpush1.msra.mxu0 0.0
      %2521 = vmatprep.subr.mxu0 0.0
      %2522 = vmatpush1.msra.mxu0 0.0
      %2523 = vmatprep.subr.mxu0 0.0
      %2524 = vmatpush1.msra.mxu0 0.0
      %v2525 = vand.u32 %v2216, 4294901760
      %2526 = vmatprep.subr.mxu0 %v2525
      %v2527 = vand.u32 %v2213, 4294901760
      %2528 = vmatpush1.msra.mxu0 %v2527
      %v2529 = vand.u32 %v1170, 4294901760
      %2530 = vmatprep.subr.mxu0 %v2529
      %v2531 = vand.u32 %v1169, 4294901760
      %2532 = vmatpush1.msra.mxu0 %v2531
      %2533 = vmatprep.subr.mxu0 0.0
      %2534 = vmatpush2.msra.mxu0 0.0
      %2535 = vmatprep.subr.mxu0 0.0
      %2536 = vmatpush2.msra.mxu0 0.0
      %2537 = vmatprep.subr.mxu0 0.0
      %2538 = vmatpush2.msra.mxu0 0.0
      %2539 = vmatprep.subr.mxu0 0.0
      %2540 = vmatpush2.msra.mxu0 0.0
      %2541 = vmatprep.subr.mxu0 0.0
      %2542 = vmatpush2.msra.mxu0 0.0
      %2543 = vmatprep.subr.mxu0 0.0
      %2544 = vmatpush2.msra.mxu0 0.0
      %2545 = vmatprep.subr.mxu0 0.0
      %2546 = vmatpush2.msra.mxu0 0.0
      %2547 = vmatprep.subr.mxu0 0.0
      %2548 = vmatpush2.msra.mxu0 0.0
      %2549 = vmatprep.subr.mxu0 0.0
      %2550 = vmatpush2.msra.mxu0 0.0
      %2551 = vmatprep.subr.mxu0 0.0
      %2552 = vmatpush2.msra.mxu0 0.0
      %2553 = vmatprep.subr.mxu0 0.0
      %2554 = vmatpush2.msra.mxu0 0.0
      %2555 = vmatprep.subr.mxu0 0.0
      %2556 = vmatpush2.msra.mxu0 0.0
      %2557 = vmatprep.subr.mxu0 0.0
      %2558 = vmatpush2.msra.mxu0 0.0
      %2559 = vmatprep.subr.mxu0 0.0
      %2560 = vmatpush2.msra.mxu0 0.0
      %2561 = vmatprep.subr.mxu0 0.0
      %2562 = vmatpush2.msra.mxu0 0.0
      %2563 = vmatprep.subr.mxu0 0.0
      %2564 = vmatpush2.msra.mxu0 0.0
      %2565 = vmatprep.mubr.f32.mxu0 0.0
      %v2566 = vand.u32 %v2207, 4294901760
      %v2567 = vsub.f32 %v2207, %v2566
      %v2568 = vand.u32 %v2567, 4294901760
      %2569 = vmatmul.mubr.f32.gmra.mxu0 %v2568
      %v2570 = vpop.f32.mrf.mxu0
      %v2571 = vadd.f32 %v2485, %v2570
      %v2572 = vpop.f32.mrf.mxu0
      %v2573 = vadd.f32 %v2487, %v2572
      %2574 = vmatprep.mubr.f32.mxu0 0.0
      %v2575 = vand.u32 %v2210, 4294901760
      %v2576 = vsub.f32 %v2210, %v2575
      %v2577 = vand.u32 %v2576, 4294901760
      %2578 = vmatmul.mubr.f32.gmra.mxu0 %v2577
      %v2579 = vpop.f32.mrf.mxu0
      %v2580 = vadd.f32 %v2493, %v2579
      %v2581 = vpop.f32.mrf.mxu0
      %v2582 = vadd.f32 %v2495, %v2581
      %2583 = vdwg.mxu0
      %2584 = vmatprep.subr.mxu0 0.0
      %2585 = vmatpush1.msra.mxu0 0.0
      %2586 = vmatprep.subr.mxu0 0.0
      %2587 = vmatpush1.msra.mxu0 0.0
      %2588 = vmatprep.subr.mxu0 0.0
      %2589 = vmatpush1.msra.mxu0 0.0
      %2590 = vmatprep.subr.mxu0 0.0
      %2591 = vmatpush1.msra.mxu0 0.0
      %2592 = vmatprep.subr.mxu0 0.0
      %2593 = vmatpush1.msra.mxu0 0.0
      %2594 = vmatprep.subr.mxu0 0.0
      %2595 = vmatpush1.msra.mxu0 0.0
      %2596 = vmatprep.subr.mxu0 0.0
      %2597 = vmatpush1.msra.mxu0 0.0
      %2598 = vmatprep.subr.mxu0 0.0
      %2599 = vmatpush1.msra.mxu0 0.0
      %2600 = vmatprep.subr.mxu0 0.0
      %2601 = vmatpush1.msra.mxu0 0.0
      %2602 = vmatprep.subr.mxu0 0.0
      %2603 = vmatpush1.msra.mxu0 0.0
      %2604 = vmatprep.subr.mxu0 0.0
      %2605 = vmatpush1.msra.mxu0 0.0
      %2606 = vmatprep.subr.mxu0 0.0
      %2607 = vmatpush1.msra.mxu0 0.0
      %2608 = vmatprep.subr.mxu0 0.0
      %2609 = vmatpush1.msra.mxu0 0.0
      %2610 = vmatprep.subr.mxu0 0.0
      %2611 = vmatpush1.msra.mxu0 0.0
      %v2612 = vand.u32 %v2216, 4294901760
      %v2613 = vsub.f32 %v2216, %v2612
      %v2614 = vand.u32 %v2613, 4294901760
      %2615 = vmatprep.subr.mxu0 %v2614
      %v2616 = vand.u32 %v2213, 4294901760
      %v2617 = vsub.f32 %v2213, %v2616
      %v2618 = vand.u32 %v2617, 4294901760
      %2619 = vmatpush1.msra.mxu0 %v2618
      %v2620 = vand.u32 %v1170, 4294901760
      %v2621 = vsub.f32 %v1170, %v2620
      %v2622 = vand.u32 %v2621, 4294901760
      %2623 = vmatprep.subr.mxu0 %v2622
      %v2624 = vand.u32 %v1169, 4294901760
      %v2625 = vsub.f32 %v1169, %v2624
      %v2626 = vand.u32 %v2625, 4294901760
      %2627 = vmatpush1.msra.mxu0 %v2626
      %2628 = vmatprep.subr.mxu0 0.0
      %2629 = vmatpush2.msra.mxu0 0.0
      %2630 = vmatprep.subr.mxu0 0.0
      %2631 = vmatpush2.msra.mxu0 0.0
      %2632 = vmatprep.subr.mxu0 0.0
      %2633 = vmatpush2.msra.mxu0 0.0
      %2634 = vmatprep.subr.mxu0 0.0
      %2635 = vmatpush2.msra.mxu0 0.0
      %2636 = vmatprep.subr.mxu0 0.0
      %2637 = vmatpush2.msra.mxu0 0.0
      %2638 = vmatprep.subr.mxu0 0.0
      %2639 = vmatpush2.msra.mxu0 0.0
      %2640 = vmatprep.subr.mxu0 0.0
      %2641 = vmatpush2.msra.mxu0 0.0
      %2642 = vmatprep.subr.mxu0 0.0
      %2643 = vmatpush2.msra.mxu0 0.0
      %2644 = vmatprep.subr.mxu0 0.0
      %2645 = vmatpush2.msra.mxu0 0.0
      %2646 = vmatprep.subr.mxu0 0.0
      %2647 = vmatpush2.msra.mxu0 0.0
      %2648 = vmatprep.subr.mxu0 0.0
      %2649 = vmatpush2.msra.mxu0 0.0
      %2650 = vmatprep.subr.mxu0 0.0
      %2651 = vmatpush2.msra.mxu0 0.0
      %2652 = vmatprep.subr.mxu0 0.0
      %2653 = vmatpush2.msra.mxu0 0.0
      %2654 = vmatprep.subr.mxu0 0.0
      %2655 = vmatpush2.msra.mxu0 0.0
      %2656 = vmatprep.subr.mxu0 0.0
      %2657 = vmatpush2.msra.mxu0 0.0
      %2658 = vmatprep.subr.mxu0 0.0
      %2659 = vmatpush2.msra.mxu0 0.0
      %2660 = vmatprep.mubr.f32.mxu0 0.0
      %v2661 = vand.u32 %v2207, 4294901760
      %2662 = vmatmul.mubr.f32.gmra.mxu0 %v2661
      %v2663 = vpop.f32.mrf.mxu0
      %v2664 = vadd.f32 %v2571, %v2663
      %v2665 = vpop.f32.mrf.mxu0
      %v2666 = vadd.f32 %v2573, %v2665
      %2667 = vmatprep.mubr.f32.mxu0 0.0
      %v2668 = vand.u32 %v2210, 4294901760
      %2669 = vmatmul.mubr.f32.gmra.mxu0 %v2668
      %v2670 = vpop.f32.mrf.mxu0
      %v2671 = vadd.f32 %v2580, %v2670
      %v2672 = vpop.f32.mrf.mxu0
      %v2673 = vadd.f32 %v2582, %v2672
      %2674 = vdwg.mxu0
      %2675 = vmatprep.subr.mxu0 0.0
      %2676 = vmatpush1.msra.mxu0 0.0
      %2677 = vmatprep.subr.mxu0 0.0
      %2678 = vmatpush1.msra.mxu0 0.0
      %2679 = vmatprep.subr.mxu0 0.0
      %2680 = vmatpush1.msra.mxu0 0.0
      %2681 = vmatprep.subr.mxu0 0.0
      %2682 = vmatpush1.msra.mxu0 0.0
      %2683 = vmatprep.subr.mxu0 0.0
      %2684 = vmatpush1.msra.mxu0 0.0
      %2685 = vmatprep.subr.mxu0 0.0
      %2686 = vmatpush1.msra.mxu0 0.0
      %2687 = vmatprep.subr.mxu0 0.0
      %2688 = vmatpush1.msra.mxu0 0.0
      %2689 = vmatprep.subr.mxu0 0.0
      %2690 = vmatpush1.msra.mxu0 0.0
      %2691 = vmatprep.subr.mxu0 0.0
      %2692 = vmatpush1.msra.mxu0 0.0
      %2693 = vmatprep.subr.mxu0 0.0
      %2694 = vmatpush1.msra.mxu0 0.0
      %2695 = vmatprep.subr.mxu0 0.0
      %2696 = vmatpush1.msra.mxu0 0.0
      %2697 = vmatprep.subr.mxu0 0.0
      %2698 = vmatpush1.msra.mxu0 0.0
      %2699 = vmatprep.subr.mxu0 0.0
      %2700 = vmatpush1.msra.mxu0 0.0
      %2701 = vmatprep.subr.mxu0 0.0
      %2702 = vmatpush1.msra.mxu0 0.0
      %v2703 = vand.u32 %v2216, 4294901760
      %2704 = vmatprep.subr.mxu0 %v2703
      %v2705 = vand.u32 %v2213, 4294901760
      %2706 = vmatpush1.msra.mxu0 %v2705
      %v2707 = vand.u32 %v1170, 4294901760
      %2708 = vmatprep.subr.mxu0 %v2707
      %v2709 = vand.u32 %v1169, 4294901760
      %2710 = vmatpush1.msra.mxu0 %v2709
      %2711 = vmatprep.subr.mxu0 0.0
      %2712 = vmatpush2.msra.mxu0 0.0
      %2713 = vmatprep.subr.mxu0 0.0
      %2714 = vmatpush2.msra.mxu0 0.0
      %2715 = vmatprep.subr.mxu0 0.0
      %2716 = vmatpush2.msra.mxu0 0.0
      %2717 = vmatprep.subr.mxu0 0.0
      %2718 = vmatpush2.msra.mxu0 0.0
      %2719 = vmatprep.subr.mxu0 0.0
      %2720 = vmatpush2.msra.mxu0 0.0
      %2721 = vmatprep.subr.mxu0 0.0
      %2722 = vmatpush2.msra.mxu0 0.0
      %2723 = vmatprep.subr.mxu0 0.0
      %2724 = vmatpush2.msra.mxu0 0.0
      %2725 = vmatprep.subr.mxu0 0.0
      %2726 = vmatpush2.msra.mxu0 0.0
      %2727 = vmatprep.subr.mxu0 0.0
      %2728 = vmatpush2.msra.mxu0 0.0
      %2729 = vmatprep.subr.mxu0 0.0
      %2730 = vmatpush2.msra.mxu0 0.0
      %2731 = vmatprep.subr.mxu0 0.0
      %2732 = vmatpush2.msra.mxu0 0.0
      %2733 = vmatprep.subr.mxu0 0.0
      %2734 = vmatpush2.msra.mxu0 0.0
      %2735 = vmatprep.subr.mxu0 0.0
      %2736 = vmatpush2.msra.mxu0 0.0
      %2737 = vmatprep.subr.mxu0 0.0
      %2738 = vmatpush2.msra.mxu0 0.0
      %2739 = vmatprep.subr.mxu0 0.0
      %2740 = vmatpush2.msra.mxu0 0.0
      %2741 = vmatprep.subr.mxu0 0.0
      %2742 = vmatpush2.msra.mxu0 0.0
      %2743 = vmatprep.mubr.f32.mxu0 0.0
      %v2744 = vand.u32 %v2207, 4294901760
      %2745 = vmatmul.mubr.f32.gmra.mxu0 %v2744
      %v2746 = vpop.f32.mrf.mxu0
      %v2747 = vadd.f32 %v2664, %v2746
      %v2748 = vpop.f32.mrf.mxu0
      %v2749 = vadd.f32 %v2666, %v2748
      %2750 = vmatprep.mubr.f32.mxu0 0.0
      %v2751 = vand.u32 %v2210, 4294901760
      %2752 = vmatmul.mubr.f32.gmra.mxu0 %v2751
      %v2753 = vpop.f32.mrf.mxu0
      %v2754 = vadd.f32 %v2671, %v2753
      %v2755 = vpop.f32.mrf.mxu0
      %v2756 = vadd.f32 %v2673, %v2755
      %2757 = vdwg.mxu0
      %2758 = vst [vmem:[%s268] sm:$0xff] %v2747
      %2759 = vst [vmem:[%s268 + $0x8] sm:$0xff] %v2749
      %2760 = vst [vmem:[%s268 + $0x10] sm:$0xf] %v2754
      %2761 = vst [vmem:[%s268 + $0x18] sm:$0xf] %v2756
      %p2762 = scmp.lt.s32.totalorder %s17, 1
      %s2763 = scalar_select %p2762, %s17, 1
      %s2764 = smul.addr %s2763, 4
      %s2765 = smul.addr %s2764, 8
      %s2766 = scalar_lea.vmem %s6, %s2765
      // Predicated region
      $region45: #{ita_forward.1} parent=43 // pred_check
        %p2767 = pneg %p171
      $region46: #{ita_forward.1} parent=43 // pred_check_branch
        %2769 = sbr.rel (%p2767) target = $region48
      $region47: #{ita_forward.1} parent=43 // pred_region
        _
      $region48: #{ita_forward.1} parent=43 // pred_fallthru
        _
    $region44: #{ita_forward.1} parent=5 // pred_fallthru
      _
    %p2770 = scmp.le.s32.totalorder 2, %s12
    // Predicated region
    $region49: #{ita_forward.1} parent=5 // pred_check
      %p2771 = pneg %p2770
    $region50: #{ita_forward.1} parent=5 // pred_check_branch
      %2773 = sbr.rel (%p2771) target = $region52
    $region51: #{ita_forward.1} parent=5 // pred_region
      %s2774 = ssub.s32 %s12, 2
      // Predicated region
      $region53: #{ita_forward.1} parent=51 // pred_check
        %p2775 = pneg %p177
      $region54: #{ita_forward.1} parent=51 // pred_check_branch
        %2777 = sbr.rel (%p2775) target = $region56
      $region55: #{ita_forward.1} parent=51 // pred_region
        %p2778 = scmp.lt.s32.totalorder %s18, 1
        %s2779 = scalar_select %p2778, %s18, 1
        %s2780 = smul.addr %s2779, 4
        %s2781 = smul.addr %s2780, 8
        %s2782 = scalar_lea.vmem %s6, %s2781
      $region56: #{ita_forward.1} parent=51 // pred_fallthru
        _
    $region52: #{ita_forward.1} parent=5 // pred_fallthru
      _
  $region6: #{ita_forward.1} parent=0 // loop_footer
    %s16 = sadd.s32 1, %s12
  $region7: #{ita_forward.1} parent=0 // loop_footer_branch
    %11 = sbr.rel target = $region3
  $region8: #{ita_forward.1} parent=0 // loop_exit
    _

</llo_original>
